<compile_context>
chip_gen: v7x
topology: tpu7x:2x2x1
jax: 0.10.0
libtpu: 0.0.40
codegen_flags: <defaults>
</compile_context>

<pallas_src>
import functools
import math

import jax
import jax.numpy as jnp
from jax import lax
from jax.experimental import pallas as pl
from jax.experimental.pallas import tpu as pltpu

FC1_UNITS = 400
FC2_UNITS = 300
FC1_PAD = 512            # lane-dense (multiple of 128)
FC2_PAD = 384            # lane-dense (multiple of 128)
OUT_PAD = 128            # lane-dense output slab (avoids masked partial stores)
BN_EPS = 1e-5
SUBLANE_BF16 = 16        # bf16 sublane packing for the activation rows
TARGET_PACK_ROWS = 256   # packed M per grid step (256-row MXU on v6e/v7x)


def _round_up(x, m):
    return (x + m - 1) // m * m


def actor_kernel(true_batch, b_pad, calls_per_step,
                 x_ref, w1_ref, g1_ref, beta1_ref,
                 w2_ref, b2_ref, w3_ref, b3_ref, out_ref):
    """One grid step == `calls_per_step` packed independent forward calls."""
    inv_b = 1.0 / float(true_batch)
    m_pack = calls_per_step * b_pad

    # ---- fc1 (bias omitted: exactly cancelled by BN mean subtraction) ------
    # x already bf16 (cast in the wrapper); accumulate in f32 on the MXU.
    h1 = jnp.dot(x_ref[...], w1_ref[...],
                 preferred_element_type=jnp.float32)          # (M, 512) f32

    # ---- per-call BatchNorm1d (training mode, biased variance) -------------
    # Reshape is tile-aligned (b_pad is a multiple of the 8-row f32 tile), so
    # it is layout plumbing only.  Padded batch rows are exactly zero pre-BN
    # (zero inputs, no fc1 bias) => plain sums / true batch == exact mean.
    h1_3d = h1.reshape(calls_per_step, b_pad, FC1_PAD)
    mean = jnp.sum(h1_3d, axis=1, keepdims=True) * inv_b      # (C, 1, 512)
    cent = h1_3d - mean
    sq = cent * cent
    if true_batch < b_pad:
        # Mask padded rows: they are 0 pre-BN, but (0 - mean)^2 != 0.
        row = lax.broadcasted_iota(jnp.int32, (b_pad, FC1_PAD), 0)
        sq = jnp.where(row < true_batch, sq, 0.0)
    var = jnp.sum(sq, axis=1, keepdims=True) * inv_b          # biased variance
    scale = g1_ref[...] * lax.rsqrt(var + BN_EPS)             # (C, 1, 512)
    h1_bn = jnp.maximum(cent * scale + beta1_ref[...], 0.0)   # BN + ReLU
    h1_bn = h1_bn.reshape(m_pack, FC1_PAD)

    # ---- fc2 + ReLU ---------------------------------------------------------
    h2 = jnp.dot(h1_bn.astype(jnp.bfloat16), w2_ref[...],
                 preferred_element_type=jnp.float32) + b2_ref[...]
    h2 = jnp.maximum(h2, 0.0)

    # ---- fc3 + tanh (lane-dense 128-wide output slab) -----------------------
    h3 = jnp.dot(h2.astype(jnp.bfloat16), w3_ref[...],
                 preferred_element_type=jnp.float32) + b3_ref[...]
    out_ref[...] = jnp.tanh(h3)


def actor_forward_stacked(xs, params):
    """Batched-over-calls forward.

    xs: (num_calls, batch, in)  ->  (num_calls, batch, out)

    Calls are packed `calls_per_step` per grid step (BN still sees each call's
    full batch via a per-call reshape-reduce); weights stay VMEM-resident
    across the grid via constant index_maps.
    """
    num_calls, batch, in_dim = xs.shape
    out_dim = int(params["out_dim"])

    b_pad = _round_up(max(batch, SUBLANE_BF16), SUBLANE_BF16)

    # Pack enough calls to fill ~256 MXU rows per step, but keep >= 2 grid
    # steps when possible so both v7x TensorCores get work.
    calls_per_step = max(1, TARGET_PACK_ROWS // b_pad)
    if num_calls >= 2:
        calls_per_step = min(calls_per_step, (num_calls + 1) // 2)
    else:
        calls_per_step = 1
    n_steps = pl.cdiv(num_calls, calls_per_step)
    num_calls_pad = n_steps * calls_per_step
    m_pack = calls_per_step * b_pad

    # Cast to bf16 + zero-pad batch rows and call count.  Zero rows stay zero
    # through fc1 (no bias), keeping per-call batch statistics exact.
    # NOTE: for a hot production loop, pre-pad/flatten once outside this
    # wrapper (or rely on XLA fusing the pad) to avoid an extra HBM round-trip.
    xs_p = jnp.pad(xs.astype(jnp.bfloat16),
                   ((0, num_calls_pad - num_calls),
                    (0, b_pad - batch),
                    (0, 0)))
    xs_flat = xs_p.reshape(num_calls_pad * b_pad, in_dim)

    kernel = functools.partial(actor_kernel, batch, b_pad, calls_per_step)
    const = lambda i: (0, 0)                      # resident weight blocks

    flops = 2 * num_calls_pad * b_pad * (in_dim * FC1_PAD
                                         + FC1_PAD * FC2_PAD
                                         + FC2_PAD * OUT_PAD)
    weight_bytes = sum(int(params[k].size) * params[k].dtype.itemsize
                       for k in ("w1", "gamma1", "beta1", "w2", "b2",
                                 "w3", "b3"))
    bytes_accessed = int(xs_flat.size * xs_flat.dtype.itemsize
                         + num_calls_pad * b_pad * OUT_PAD * 4
                         + weight_bytes)

    out = pl.pallas_call(
        kernel,
        out_shape=jax.ShapeDtypeStruct((num_calls_pad * b_pad, OUT_PAD),
                                       jnp.float32),
        grid_spec=pltpu.PrefetchScalarGridSpec(
            num_scalar_prefetch=0,
            grid=(n_steps,),
            in_specs=[
                pl.BlockSpec((m_pack, in_dim), lambda i: (i, 0)),  # packed x
                pl.BlockSpec((in_dim, FC1_PAD), const),            # w1 (resident)
                pl.BlockSpec((1, FC1_PAD), const),                 # gamma1
                pl.BlockSpec((1, FC1_PAD), const),                 # beta1
                pl.BlockSpec((FC1_PAD, FC2_PAD), const),           # w2 (resident)
                pl.BlockSpec((1, FC2_PAD), const),                 # b2
                pl.BlockSpec((FC2_PAD, OUT_PAD), const),           # w3 (resident)
                pl.BlockSpec((1, OUT_PAD), const),                 # b3
            ],
            out_specs=pl.BlockSpec((m_pack, OUT_PAD), lambda i: (i, 0)),
        ),
        compiler_params=pltpu.CompilerParams(
            dimension_semantics=("parallel",)),
        cost_estimate=pl.CostEstimate(
            flops=flops,
            transcendentals=num_calls_pad * (b_pad * OUT_PAD + FC1_PAD),
            bytes_accessed=bytes_accessed),
    )(xs_flat, params["w1"], params["gamma1"], params["beta1"],
      params["w2"], params["b2"], params["w3"], params["b3"])

    out = out.reshape(num_calls_pad, b_pad, OUT_PAD)
    return out[:num_calls, :batch, :out_dim]


def actor_forward(x, params):
    """Single forward call (matches the torch module): x (B, in) -> (B, out).

    NOTE: at grid=1 / tiny batch this path is launch-latency bound; in
    production either batch calls before entering the kernel or use the
    pure-JAX reference for the single-call case.
    """
    return actor_forward_stacked(x[None], params)[0]


def init_actor_params(key, in_shape, out_shape,
                      fc1_units=FC1_UNITS, fc2_units=FC2_UNITS):
    """Parameter init mirroring the torch module, stored padded + bf16."""
    ks = jax.random.split(key, 5)

    def xavier_uniform(k, fan_in, fan_out):
        limit = math.sqrt(6.0 / (fan_in + fan_out))
        return jax.random.uniform(k, (fan_in, fan_out), jnp.float32,
                                  -limit, limit)

    def linear_bias(k, fan_in, n):
        bound = 1.0 / math.sqrt(fan_in)
        return jax.random.uniform(k, (1, n), jnp.float32, -bound, bound)

    def pad_to(a, rows, cols):
        return jnp.pad(a, ((0, rows - a.shape[0]), (0, cols - a.shape[1])))

    w1 = xavier_uniform(ks[0], in_shape, fc1_units)
    w2 = xavier_uniform(ks[1], fc1_units, fc2_units)
    b2 = linear_bias(ks[2], fc1_units, fc2_units)
    w3 = jax.random.uniform(ks[3], (fc2_units, out_shape), jnp.float32,
                            -0.003, 0.003)
    b3 = linear_bias(ks[4], fc2_units, out_shape)

    # NOTE: fc1 bias is intentionally omitted — training-mode BatchNorm's
    # per-feature mean subtraction cancels it exactly, so the forward output
    # is unchanged.  (Eval-mode / running-stats BN would need it back.)
    return {
        "w1": pad_to(w1, in_shape, FC1_PAD).astype(jnp.bfloat16),
        "gamma1": pad_to(jnp.ones((1, fc1_units), jnp.float32), 1, FC1_PAD),
        "beta1": jnp.zeros((1, FC1_PAD), jnp.float32),
        "w2": pad_to(w2, FC1_PAD, FC2_PAD).astype(jnp.bfloat16),
        "b2": pad_to(b2, 1, FC2_PAD),
        "w3": pad_to(w3, FC2_PAD, OUT_PAD).astype(jnp.bfloat16),
        "b3": pad_to(b3, 1, OUT_PAD),
        "out_dim": out_shape,   # true (unpadded) action dim
    }


def actor_reference(x, p, fc1_units=FC1_UNITS, fc2_units=FC2_UNITS):
    """Pure-JAX reference mirroring the kernel's bf16-matmul / f32-acc math."""
    out_dim = int(p["out_dim"])
    w1 = p["w1"][:, :fc1_units]
    g1 = p["gamma1"][:, :fc1_units]
    beta1 = p["beta1"][:, :fc1_units]
    w2 = p["w2"][:fc1_units, :fc2_units]
    b2 = p["b2"][:, :fc2_units]
    w3 = p["w3"][:fc2_units, :out_dim]
    b3 = p["b3"][:, :out_dim]

    h1 = jnp.dot(x.astype(jnp.bfloat16), w1,
                 preferred_element_type=jnp.float32)
    mean = jnp.mean(h1, axis=0, keepdims=True)
    var = jnp.mean((h1 - mean) ** 2, axis=0, keepdims=True)   # biased variance
    h1 = (h1 - mean) * lax.rsqrt(var + BN_EPS) * g1 + beta1
    h1 = jnp.maximum(h1, 0.0)
    h2 = jnp.maximum(jnp.dot(h1.astype(jnp.bfloat16), w2,
                             preferred_element_type=jnp.float32) + b2, 0.0)
    return jnp.tanh(jnp.dot(h2.astype(jnp.bfloat16), w3,
                            preferred_element_type=jnp.float32) + b3)


if __name__ == "__main__":
    IN_SHAPE = 32     # state dim
    OUT_SHAPE = 8     # action dim
    BATCH = 4
    NUM_CALLS = 3     # independent forward calls sharing resident weights

    key = jax.random.PRNGKey(0)
    k_params, k_x1, k_x2 = jax.random.split(key, 3)

    params = init_actor_params(k_params, IN_SHAPE, OUT_SHAPE)

    # Single call (matches the torch module's forward).
    x = jax.random.normal(k_x1, (BATCH, IN_SHAPE), jnp.float32)
    out = jax.block_until_ready(actor_forward(x, params))
    ref = actor_reference(x, params)
    assert out.shape == (BATCH, OUT_SHAPE)
    assert jnp.allclose(out, ref, atol=1e-2, rtol=1e-2), "single-call mismatch"

    # Stacked independent calls: packed per grid step, weights VMEM-resident.
    xs = jax.random.normal(k_x2, (NUM_CALLS, BATCH, IN_SHAPE), jnp.float32)
    outs = jax.block_until_ready(actor_forward_stacked(xs, params))
    refs = jnp.stack([actor_reference(xs[i], params)
                      for i in range(NUM_CALLS)])
    assert outs.shape == (NUM_CALLS, BATCH, OUT_SHAPE)
    assert jnp.allclose(outs, refs, atol=1e-2, rtol=1e-2), "stacked mismatch"

    print("KERNEL_OK")
</pallas_src>

<mosaic_0001>
module attributes {stable_mosaic.version = 11 : i64} {
  func.func @actor_kernel(%arg0: i32, %arg1: memref<16x32xbf16, #tpu.memory_space<vmem>>, %arg2: memref<32x512xbf16, #tpu.memory_space<vmem>>, %arg3: memref<1x512xf32, #tpu.memory_space<vmem>>, %arg4: memref<1x512xf32, #tpu.memory_space<vmem>>, %arg5: memref<512x384xbf16, #tpu.memory_space<vmem>>, %arg6: memref<1x384xf32, #tpu.memory_space<vmem>>, %arg7: memref<384x128xbf16, #tpu.memory_space<vmem>>, %arg8: memref<1x128xf32, #tpu.memory_space<vmem>>, %arg9: memref<16x128xf32, #tpu.memory_space<vmem>>) attributes {dimension_semantics = [#tpu.dimension_semantics<parallel>], iteration_bounds = array<i64: 1>, scalar_prefetch = 0 : i64, scratch_operands = 0 : i64, tpu.core_type = #tpu.core_type<tc>, window_params = [{transform_indices = @transform_0, window_bounds = array<i64: 16, 32>}, {pipeline_mode = #tpu.pipeline_mode<synchronous>, transform_indices = @transform_1, window_bounds = array<i64: 32, 512>}, {pipeline_mode = #tpu.pipeline_mode<synchronous>, transform_indices = @transform_2, window_bounds = array<i64: 1, 512>}, {pipeline_mode = #tpu.pipeline_mode<synchronous>, transform_indices = @transform_3, window_bounds = array<i64: 1, 512>}, {pipeline_mode = #tpu.pipeline_mode<synchronous>, transform_indices = @transform_4, window_bounds = array<i64: 512, 384>}, {pipeline_mode = #tpu.pipeline_mode<synchronous>, transform_indices = @transform_5, window_bounds = array<i64: 1, 384>}, {pipeline_mode = #tpu.pipeline_mode<synchronous>, transform_indices = @transform_6, window_bounds = array<i64: 384, 128>}, {pipeline_mode = #tpu.pipeline_mode<synchronous>, transform_indices = @transform_7, window_bounds = array<i64: 1, 128>}, {transform_indices = @transform_8, window_bounds = array<i64: 16, 128>}]} {
    %c0 = arith.constant 0 : index
    %c0_0 = arith.constant 0 : index
    %0 = vector.load %arg1[%c0, %c0_0] : memref<16x32xbf16, #tpu.memory_space<vmem>>, vector<16x32xbf16>
    %c0_1 = arith.constant 0 : index
    %c0_2 = arith.constant 0 : index
    %1 = vector.load %arg2[%c0_1, %c0_2] : memref<32x512xbf16, #tpu.memory_space<vmem>>, vector<32x512xbf16>
    %cst = arith.constant dense<0.000000e+00> : vector<16x512xf32>
    %2 = tpu.matmul %0, %1, %cst {dimension_numbers = #tpu.dot_dimension_numbers<[1], [0], [0], [1], [0, 0, 1, 1], [], []>} : vector<16x32xbf16>, vector<32x512xbf16>, vector<16x512xf32> -> vector<16x512xf32>
    %3 = vector.shape_cast %2 : vector<16x512xf32> to vector<1x16x512xf32>
    %cst_3 = arith.constant dense<0.000000e+00> : vector<1x512xf32>
    %4 = vector.multi_reduction <add>, %3, %cst_3 [1] : vector<1x16x512xf32> to vector<1x512xf32>
    %5 = vector.shape_cast %4 : vector<1x512xf32> to vector<1x1x512xf32>
    %cst_4 = arith.constant 2.500000e-01 : f32
    %6 = vector.broadcast %cst_4 : f32 to vector<1x1x512xf32>
    %7 = arith.mulf %5, %6 : vector<1x1x512xf32>
    %8 = vector.broadcast %7 : vector<1x1x512xf32> to vector<1x16x512xf32>
    %9 = arith.subf %3, %8 : vector<1x16x512xf32>
    %10 = arith.mulf %9, %9 : vector<1x16x512xf32>
    %11 = tpu.iota {dimensions = array<i32: 0>} : vector<16x512xi32>
    %c4_i32 = arith.constant 4 : i32
    %12 = vector.broadcast %c4_i32 : i32 to vector<16x512xi32>
    %13 = arith.cmpi slt, %11, %12 : vector<16x512xi32>
    %cst_5 = arith.constant 0.000000e+00 : f32
    %14 = vector.shape_cast %13 : vector<16x512xi1> to vector<1x16x512xi1>
    %15 = vector.broadcast %cst_5 : f32 to vector<1x16x512xf32>
    %16 = arith.select %14, %10, %15 : vector<1x16x512xi1>, vector<1x16x512xf32>
    %cst_6 = arith.constant dense<0.000000e+00> : vector<1x512xf32>
    %17 = vector.multi_reduction <add>, %16, %cst_6 [1] : vector<1x16x512xf32> to vector<1x512xf32>
    %18 = vector.shape_cast %17 : vector<1x512xf32> to vector<1x1x512xf32>
    %cst_7 = arith.constant 2.500000e-01 : f32
    %19 = vector.broadcast %cst_7 : f32 to vector<1x1x512xf32>
    %20 = arith.mulf %18, %19 : vector<1x1x512xf32>
    %c0_8 = arith.constant 0 : index
    %c0_9 = arith.constant 0 : index
    %21 = vector.load %arg3[%c0_8, %c0_9] : memref<1x512xf32, #tpu.memory_space<vmem>>, vector<1x512xf32>
    %cst_10 = arith.constant 9.99999974E-6 : f32
    %22 = vector.broadcast %cst_10 : f32 to vector<1x1x512xf32>
    %23 = arith.addf %20, %22 : vector<1x1x512xf32>
    %24 = math.rsqrt %23 : vector<1x1x512xf32>
    %25 = vector.shape_cast %21 : vector<1x512xf32> to vector<1x1x512xf32>
    %26 = arith.mulf %25, %24 : vector<1x1x512xf32>
    %27 = vector.broadcast %26 : vector<1x1x512xf32> to vector<1x16x512xf32>
    %28 = arith.mulf %9, %27 : vector<1x16x512xf32>
    %c0_11 = arith.constant 0 : index
    %c0_12 = arith.constant 0 : index
    %29 = vector.load %arg4[%c0_11, %c0_12] : memref<1x512xf32, #tpu.memory_space<vmem>>, vector<1x512xf32>
    %30 = vector.shape_cast %29 : vector<1x512xf32> to vector<1x1x512xf32>
    %31 = vector.broadcast %30 : vector<1x1x512xf32> to vector<1x16x512xf32>
    %32 = arith.addf %28, %31 : vector<1x16x512xf32>
    %cst_13 = arith.constant 0.000000e+00 : f32
    %33 = vector.broadcast %cst_13 : f32 to vector<1x16x512xf32>
    %34 = arith.maximumf %32, %33 : vector<1x16x512xf32>
    %35 = vector.shape_cast %34 : vector<1x16x512xf32> to vector<16x512xf32>
    %36 = arith.truncf %35 : vector<16x512xf32> to vector<16x512xbf16>
    %c0_14 = arith.constant 0 : index
    %c0_15 = arith.constant 0 : index
    %37 = vector.load %arg5[%c0_14, %c0_15] : memref<512x384xbf16, #tpu.memory_space<vmem>>, vector<512x384xbf16>
    %cst_16 = arith.constant dense<0.000000e+00> : vector<16x384xf32>
    %38 = tpu.matmul %36, %37, %cst_16 {dimension_numbers = #tpu.dot_dimension_numbers<[1], [0], [0], [1], [0, 0, 1, 1], [], []>} : vector<16x512xbf16>, vector<512x384xbf16>, vector<16x384xf32> -> vector<16x384xf32>
    %c0_17 = arith.constant 0 : index
    %c0_18 = arith.constant 0 : index
    %39 = vector.load %arg6[%c0_17, %c0_18] : memref<1x384xf32, #tpu.memory_space<vmem>>, vector<1x384xf32>
    %40 = vector.broadcast %39 : vector<1x384xf32> to vector<16x384xf32>
    %41 = arith.addf %38, %40 : vector<16x384xf32>
    %cst_19 = arith.constant 0.000000e+00 : f32
    %42 = vector.broadcast %cst_19 : f32 to vector<16x384xf32>
    %43 = arith.maximumf %41, %42 : vector<16x384xf32>
    %44 = arith.truncf %43 : vector<16x384xf32> to vector<16x384xbf16>
    %c0_20 = arith.constant 0 : index
    %c0_21 = arith.constant 0 : index
    %45 = vector.load %arg7[%c0_20, %c0_21] : memref<384x128xbf16, #tpu.memory_space<vmem>>, vector<384x128xbf16>
    %cst_22 = arith.constant dense<0.000000e+00> : vector<16x128xf32>
    %46 = tpu.matmul %44, %45, %cst_22 {dimension_numbers = #tpu.dot_dimension_numbers<[1], [0], [0], [1], [0, 0, 1, 1], [], []>} : vector<16x384xbf16>, vector<384x128xbf16>, vector<16x128xf32> -> vector<16x128xf32>
    %c0_23 = arith.constant 0 : index
    %c0_24 = arith.constant 0 : index
    %47 = vector.load %arg8[%c0_23, %c0_24] : memref<1x128xf32, #tpu.memory_space<vmem>>, vector<1x128xf32>
    %48 = vector.broadcast %47 : vector<1x128xf32> to vector<16x128xf32>
    %49 = arith.addf %46, %48 : vector<16x128xf32>
    %50 = math.tanh %49 : vector<16x128xf32>
    %c0_25 = arith.constant 0 : index
    %c0_26 = arith.constant 0 : index
    %51 = vector.load %arg9[%c0_25, %c0_26] : memref<16x128xf32, #tpu.memory_space<vmem>>, vector<16x128xf32>
    tpu.vector_store %arg9[%c0_25, %c0_26], %50 {strides = array<i32>} : memref<16x128xf32, #tpu.memory_space<vmem>>, vector<16x128xf32>,
    return
  }
  func.func @transform_0(%arg0: i32) -> (i32, i32) {
    %c0_i32 = arith.constant 0 : i32
    %c0_i32_0 = arith.constant 0 : i32
    return %arg0, %c0_i32 : i32, i32
  }
  func.func @transform_1(%arg0: i32) -> (i32, i32) {
    %c0_i32 = arith.constant 0 : i32
    %c0_i32_0 = arith.constant 0 : i32
    %c0_i32_1 = arith.constant 0 : i32
    return %c0_i32, %c0_i32_0 : i32, i32
  }
  func.func @transform_2(%arg0: i32) -> (i32, i32) {
    %c0_i32 = arith.constant 0 : i32
    %c0_i32_0 = arith.constant 0 : i32
    %c0_i32_1 = arith.constant 0 : i32
    return %c0_i32, %c0_i32_0 : i32, i32
  }
  func.func @transform_3(%arg0: i32) -> (i32, i32) {
    %c0_i32 = arith.constant 0 : i32
    %c0_i32_0 = arith.constant 0 : i32
    %c0_i32_1 = arith.constant 0 : i32
    return %c0_i32, %c0_i32_0 : i32, i32
  }
  func.func @transform_4(%arg0: i32) -> (i32, i32) {
    %c0_i32 = arith.constant 0 : i32
    %c0_i32_0 = arith.constant 0 : i32
    %c0_i32_1 = arith.constant 0 : i32
    return %c0_i32, %c0_i32_0 : i32, i32
  }
  func.func @transform_5(%arg0: i32) -> (i32, i32) {
    %c0_i32 = arith.constant 0 : i32
    %c0_i32_0 = arith.constant 0 : i32
    %c0_i32_1 = arith.constant 0 : i32
    return %c0_i32, %c0_i32_0 : i32, i32
  }
  func.func @transform_6(%arg0: i32) -> (i32, i32) {
    %c0_i32 = arith.constant 0 : i32
    %c0_i32_0 = arith.constant 0 : i32
    %c0_i32_1 = arith.constant 0 : i32
    return %c0_i32, %c0_i32_0 : i32, i32
  }
  func.func @transform_7(%arg0: i32) -> (i32, i32) {
    %c0_i32 = arith.constant 0 : i32
    %c0_i32_0 = arith.constant 0 : i32
    %c0_i32_1 = arith.constant 0 : i32
    return %c0_i32, %c0_i32_0 : i32, i32
  }
  func.func @transform_8(%arg0: i32) -> (i32, i32) {
    %c0_i32 = arith.constant 0 : i32
    %c0_i32_0 = arith.constant 0 : i32
    return %arg0, %c0_i32 : i32, i32
  }
}

</mosaic_0001>

<llo_original>
// kernel: tpu_custom_call.1
$region0: #{tpu_custom_call.1}
  #allocation0 [shape = 'u32[]', space=smem, size = 0x4, offset = 0x4, fixed_abs, tag = 'smem constant byte address 0x4 - core index']
  #allocation1 [shape = 'u32[144,128]{1,0:T(1,128)}', space=vmem, size = 0x12000, scoped, tag = 'internal scratch']
  %s0 = inlined_call_operand.hbm [shape: bf16[16,32], index: 0, kind: input, shape index: {}]
  %s1 = inlined_call_operand.hbm [shape: bf16[32,512], index: 1, kind: input, shape index: {}]
  %s2 = inlined_call_operand.vmem [shape: f32[1,512], index: 2, kind: input, shape index: {}]
  %s3 = inlined_call_operand.vmem [shape: f32[1,512], index: 3, kind: input, shape index: {}]
  %s4 = inlined_call_operand.hbm [shape: bf16[512,384], index: 4, kind: input, shape index: {}]
  %s5 = inlined_call_operand.vmem [shape: f32[1,384], index: 5, kind: input, shape index: {}]
  %s6 = inlined_call_operand.hbm [shape: bf16[384,128], index: 6, kind: input, shape index: {}]
  %s7 = inlined_call_operand.vmem [shape: f32[1,128], index: 7, kind: input, shape index: {}]
  %s8 = inlined_call_operand.hbm [shape: f32[16,128], index: 8, kind: output, shape index: {}]
  %s9 = sld [smem:[#allocation0]]
  $region58: #{tpu_custom_call.1} parent=0
    _
  %s11 = ssub.s32 1, %s9
  %s12 = scalar_select 0, %s11, %s9
  $region1: #{tpu_custom_call.1} parent=0
    #allocation2 [shape = 'u8[4096]{0}', space=vmem, size = 0x1000, scoped, tag = 'input window, operand 0, single buffered']
    #allocation3 [shape = 's32[1]{0}', space=sflag, size = 0x4, scoped, tag = 'scoped memory for tpu_custom_call.1']
    #allocation4 [shape = 's32[1]{0}', space=sflag, size = 0x4, scoped, tag = 'scoped memory for tpu_custom_call.1']
    #allocation5 [shape = 'u8[32768]{0}', space=vmem, size = 0x8000, scoped, tag = 'input window, operand 1, single buffered']
    #allocation6 [shape = 's32[1]{0}', space=sflag, size = 0x4, scoped, tag = 'scoped memory for tpu_custom_call.1']
    #allocation7 [shape = 'u8[393216]{0}', space=vmem, size = 0x60000, scoped, tag = 'input window, operand 4, single buffered']
    #allocation8 [shape = 'u8[98304]{0}', space=vmem, size = 0x18000, scoped, tag = 'input window, operand 6, single buffered']
    #allocation9 [shape = 's32[1]{0}', space=sflag, size = 0x4, scoped, tag = 'scoped memory for tpu_custom_call.1']
    #allocation10 [shape = 'u8[8192]{0}', space=vmem, size = 0x2000, scoped, tag = 'output window, operand 0, single buffered']
    %13 = vsyncpa [#allocation3], 0
    %14 = vsyncpa [#allocation6], 0
    %15 = vsyncpa [#allocation9], 0
    %16 = vsyncpa [#allocation4], 0
    // Predicated region
    $region2: #{tpu_custom_call.1} parent=1 // pred_check
      _
    $region3: #{tpu_custom_call.1} parent=1 // pred_check_branch
      %18 = sbr.rel (0) target = $region5
    $region4: #{tpu_custom_call.1} parent=1 // pred_region
      %s20 = ssub.s32 128, 128
      %21 = vsyncadd [#allocation3], %s20
      %s22 = sshll.u32 [#allocation2], 4
      %s23 = int_to_ptr.vmem [resolvable:$true] %s22
      %28 = dma.hbm_to_vmem [thread:$0]  %s0, 128, %s23, [#allocation3], 64, 64, 4
    $region5: #{tpu_custom_call.1} parent=1 // pred_fallthru
      _
    // Predicated region
    $region6: #{tpu_custom_call.1} parent=1 // pred_check
      _
    $region7: #{tpu_custom_call.1} parent=1 // pred_check_branch
      %30 = sbr.rel (0) target = $region9
    $region8: #{tpu_custom_call.1} parent=1 // pred_region
      %s32 = ssub.s32 1024, 1024
      %33 = vsyncadd [#allocation6], %s32
      %s34 = sshll.u32 [#allocation5], 4
      %s35 = int_to_ptr.vmem [resolvable:$true] %s34
      %40 = dma.hbm_to_vmem [thread:$0]  %s1, 1024, %s35, [#allocation6], 256, 256, 16
    $region9: #{tpu_custom_call.1} parent=1 // pred_fallthru
      _
    // Predicated region
    $region10: #{tpu_custom_call.1} parent=1 // pred_check
      _
    $region11: #{tpu_custom_call.1} parent=1 // pred_check_branch
      %42 = sbr.rel (0) target = $region13
    $region12: #{tpu_custom_call.1} parent=1 // pred_region
      _
    $region13: #{tpu_custom_call.1} parent=1 // pred_fallthru
      _
    // Predicated region
    $region14: #{tpu_custom_call.1} parent=1 // pred_check
      _
    $region15: #{tpu_custom_call.1} parent=1 // pred_check_branch
      %44 = sbr.rel (0) target = $region17
    $region16: #{tpu_custom_call.1} parent=1 // pred_region
      _
    $region17: #{tpu_custom_call.1} parent=1 // pred_fallthru
      _
    // Predicated region
    $region18: #{tpu_custom_call.1} parent=1 // pred_check
      _
    $region19: #{tpu_custom_call.1} parent=1 // pred_check_branch
      %46 = sbr.rel (0) target = $region21
    $region20: #{tpu_custom_call.1} parent=1 // pred_region
      %s48 = ssub.s32 12288, 12288
      %49 = vsyncadd [#allocation6], %s48
      %s50 = sshll.u32 [#allocation7], 4
      %s51 = int_to_ptr.vmem [resolvable:$true] %s50
      %56 = dma.hbm_to_vmem [thread:$0]  %s4, 12288, %s51, [#allocation6], 192, 192, 12
    $region21: #{tpu_custom_call.1} parent=1 // pred_fallthru
      _
    // Predicated region
    $region22: #{tpu_custom_call.1} parent=1 // pred_check
      _
    $region23: #{tpu_custom_call.1} parent=1 // pred_check_branch
      %58 = sbr.rel (0) target = $region25
    $region24: #{tpu_custom_call.1} parent=1 // pred_region
      _
    $region25: #{tpu_custom_call.1} parent=1 // pred_fallthru
      _
    // Predicated region
    $region26: #{tpu_custom_call.1} parent=1 // pred_check
      _
    $region27: #{tpu_custom_call.1} parent=1 // pred_check_branch
      %60 = sbr.rel (0) target = $region29
    $region28: #{tpu_custom_call.1} parent=1 // pred_region
      %s62 = ssub.s32 3072, 3072
      %63 = vsyncadd [#allocation9], %s62
      %s64 = sshll.u32 [#allocation8], 4
      %s65 = int_to_ptr.vmem [resolvable:$true] %s64
      %70 = dma.hbm_to_vmem [thread:$0]  %s6, 3072, %s65, [#allocation9], 64, 64, 4
    $region29: #{tpu_custom_call.1} parent=1 // pred_fallthru
      _
    // Predicated region
    $region30: #{tpu_custom_call.1} parent=1 // pred_check
      _
    $region31: #{tpu_custom_call.1} parent=1 // pred_check_branch
      %72 = sbr.rel (0) target = $region33
    $region32: #{tpu_custom_call.1} parent=1 // pred_region
      _
    $region33: #{tpu_custom_call.1} parent=1 // pred_fallthru
      _
    // Predicated region
    $region34: #{tpu_custom_call.1} parent=1 // pred_check
      _
    $region35: #{tpu_custom_call.1} parent=1 // pred_check_branch
      %74 = sbr.rel (0) target = $region37
    $region36: #{tpu_custom_call.1} parent=1 // pred_region
      %75 = dma.done [#allocation3], 128
    $region37: #{tpu_custom_call.1} parent=1 // pred_fallthru
      _
    // Predicated region
    $region38: #{tpu_custom_call.1} parent=1 // pred_check
      _
    $region39: #{tpu_custom_call.1} parent=1 // pred_check_branch
      %77 = sbr.rel (0) target = $region41
    $region40: #{tpu_custom_call.1} parent=1 // pred_region
      %78 = dma.done [#allocation6], 1024
    $region41: #{tpu_custom_call.1} parent=1 // pred_fallthru
      _
    // Predicated region
    $region42: #{tpu_custom_call.1} parent=1 // pred_check
      _
    $region43: #{tpu_custom_call.1} parent=1 // pred_check_branch
      %80 = sbr.rel (0) target = $region45
    $region44: #{tpu_custom_call.1} parent=1 // pred_region
      %81 = dma.done [#allocation6], 12288
    $region45: #{tpu_custom_call.1} parent=1 // pred_fallthru
      _
    // Predicated region
    $region46: #{tpu_custom_call.1} parent=1 // pred_check
      _
    $region47: #{tpu_custom_call.1} parent=1 // pred_check_branch
      %83 = sbr.rel (0) target = $region49
    $region48: #{tpu_custom_call.1} parent=1 // pred_region
      %84 = dma.done [#allocation9], 3072
    $region49: #{tpu_custom_call.1} parent=1 // pred_fallthru
      _
    %v86 = vld [vmem:[#allocation2] sm:$0xf]
    %v87 = vld [vmem:[#allocation2 + $0x4] sm:$0xf]
    %v88 = vld [vmem:[#allocation5] sm:$0xff]
    %v89 = vld [vmem:[#allocation5 + $0x8] sm:$0xff]
    %v90 = vld [vmem:[#allocation5 + $0x10] sm:$0xff]
    %v91 = vld [vmem:[#allocation5 + $0x18] sm:$0xff]
    %v92 = vld [vmem:[#allocation5 + $0x20] sm:$0xff]
    %v93 = vld [vmem:[#allocation5 + $0x28] sm:$0xff]
    %v94 = vld [vmem:[#allocation5 + $0x30] sm:$0xff]
    %v95 = vld [vmem:[#allocation5 + $0x38] sm:$0xff]
    %v98 = vunpack.c.l.b16 %v86
    %v99 = vunpack.c.l.b16 %v87
    %v100 = vpack.c.b16 %v99, %v98
    %v109 = vunpack.c.l.b16 %v88
    %v110 = vunpack.c.h.b16 %v88
    %v111 = vunpack.c.l.b16 %v89
    %v112 = vunpack.c.h.b16 %v89
    %v113 = vunpack.c.l.b16 %v90
    %v114 = vunpack.c.h.b16 %v90
    %v115 = vunpack.c.l.b16 %v91
    %v116 = vunpack.c.h.b16 %v91
    %v117 = vunpack.c.l.b16 %v92
    %v118 = vunpack.c.h.b16 %v92
    %v119 = vunpack.c.l.b16 %v93
    %v120 = vunpack.c.h.b16 %v93
    %v121 = vunpack.c.l.b16 %v94
    %v122 = vunpack.c.h.b16 %v94
    %v123 = vunpack.c.l.b16 %v95
    %v124 = vunpack.c.h.b16 %v95
    %v125 = vpack.c.b16 %v113, %v109
    %v126 = vpack.c.b16 %v114, %v110
    %v127 = vpack.c.b16 %v115, %v111
    %v128 = vpack.c.b16 %v116, %v112
    %v129 = vpack.c.b16 %v121, %v117
    %v130 = vpack.c.b16 %v122, %v118
    %v131 = vpack.c.b16 %v123, %v119
    %v132 = vpack.c.b16 %v124, %v120
    %vm141 = vcmask 261120
    %v143 = vsel %vm141, %v100, 0
    %145 = vmatprep.subr.bf16.mxu0 %v126
    %146 = vmatpush1.bf16.msra.mxu0 %v125
    %147 = vmatprep.subr.bf16.mxu0 %v130
    %148 = vmatpush1.bf16.msra.mxu0 %v129
    %149 = vmatprep.subr.bf16.mxu0 0
    %150 = vmatpush1.bf16.msra.mxu0 0
    %151 = vmatprep.subr.bf16.mxu0 0
    %152 = vmatpush1.bf16.msra.mxu0 0
    %153 = vmatprep.subr.bf16.mxu0 0
    %154 = vmatpush1.bf16.msra.mxu0 0
    %155 = vmatprep.subr.bf16.mxu0 0
    %156 = vmatpush1.bf16.msra.mxu0 0
    %157 = vmatprep.subr.bf16.mxu0 0
    %158 = vmatpush1.bf16.msra.mxu0 0
    %159 = vmatprep.subr.bf16.mxu0 0
    %160 = vmatpush1.bf16.msra.mxu0 0
    %161 = vmatprep.subr.bf16.mxu0 0
    %162 = vmatpush1.bf16.msra.mxu0 0
    %163 = vmatprep.subr.bf16.mxu0 0
    %164 = vmatpush1.bf16.msra.mxu0 0
    %165 = vmatprep.subr.bf16.mxu0 0
    %166 = vmatpush1.bf16.msra.mxu0 0
    %167 = vmatprep.subr.bf16.mxu0 0
    %168 = vmatpush1.bf16.msra.mxu0 0
    %169 = vmatprep.subr.bf16.mxu0 0
    %170 = vmatpush1.bf16.msra.mxu0 0
    %171 = vmatprep.subr.bf16.mxu0 0
    %172 = vmatpush1.bf16.msra.mxu0 0
    %173 = vmatprep.subr.bf16.mxu0 0
    %174 = vmatpush1.bf16.msra.mxu0 0
    %175 = vmatprep.subr.bf16.mxu0 0
    %176 = vmatpush1.bf16.msra.mxu0 0
    %177 = vmatprep.mubr.bf16.mxu0 0
    %178 = vmatmul.mubr.bf16.gmra.mrb[0].mxu0 %v143
    %v179 = vpop.f32.mrb[0].mxu0
    %v180 = vadd.f32 0.0, %v179
    %v181 = vpop.f32.mrb[0].mxu0
    %v182 = vadd.f32 0.0, %v181
    %v183 = vpop.f32.mrb[0].mxu0
    %v184 = vadd.f32 0.0, %v183
    %v185 = vpop.f32.mrb[0].mxu0
    %v186 = vadd.f32 0.0, %v185
    %187 = vdwg.mxu0
    %188 = vmatprep.subr.bf16.mxu0 %v128
    %189 = vmatpush1.bf16.msra.mxu0 %v127
    %190 = vmatprep.subr.bf16.mxu0 %v132
    %191 = vmatpush1.bf16.msra.mxu0 %v131
    %192 = vmatprep.subr.bf16.mxu0 0
    %193 = vmatpush1.bf16.msra.mxu0 0
    %194 = vmatprep.subr.bf16.mxu0 0
    %195 = vmatpush1.bf16.msra.mxu0 0
    %196 = vmatprep.subr.bf16.mxu0 0
    %197 = vmatpush1.bf16.msra.mxu0 0
    %198 = vmatprep.subr.bf16.mxu0 0
    %199 = vmatpush1.bf16.msra.mxu0 0
    %200 = vmatprep.subr.bf16.mxu0 0
    %201 = vmatpush1.bf16.msra.mxu0 0
    %202 = vmatprep.subr.bf16.mxu0 0
    %203 = vmatpush1.bf16.msra.mxu0 0
    %204 = vmatprep.subr.bf16.mxu0 0
    %205 = vmatpush1.bf16.msra.mxu0 0
    %206 = vmatprep.subr.bf16.mxu0 0
    %207 = vmatpush1.bf16.msra.mxu0 0
    %208 = vmatprep.subr.bf16.mxu0 0
    %209 = vmatpush1.bf16.msra.mxu0 0
    %210 = vmatprep.subr.bf16.mxu0 0
    %211 = vmatpush1.bf16.msra.mxu0 0
    %212 = vmatprep.subr.bf16.mxu0 0
    %213 = vmatpush1.bf16.msra.mxu0 0
    %214 = vmatprep.subr.bf16.mxu0 0
    %215 = vmatpush1.bf16.msra.mxu0 0
    %216 = vmatprep.subr.bf16.mxu0 0
    %217 = vmatpush1.bf16.msra.mxu0 0
    %218 = vmatprep.subr.bf16.mxu0 0
    %219 = vmatpush1.bf16.msra.mxu0 0
    %220 = vmatprep.mubr.bf16.mxu0 0
    %221 = vmatmul.mubr.bf16.gmra.mrb[0].mxu0 %v143
    %v222 = vpop.f32.mrb[0].mxu0
    %v223 = vadd.f32 0.0, %v222
    %v224 = vpop.f32.mrb[0].mxu0
    %v225 = vadd.f32 0.0, %v224
    %v226 = vpop.f32.mrb[0].mxu0
    %v227 = vadd.f32 0.0, %v226
    %v228 = vpop.f32.mrb[0].mxu0
    %v229 = vadd.f32 0.0, %v228
    %230 = vdwg.mxu0
    %v231 = vadd.f32 %v180, %v184
    %v232 = vrot.slane %v231, 4
    %v233 = vadd.f32 %v231, %v232
    %v234 = vrot.slane %v233, 2
    %v235 = vadd.f32 %v233, %v234
    %v236 = vrot.slane %v235, 1
    %v237 = vadd.f32 %v235, %v236
    %v238 = vadd.f32 %v182, %v186
    %v239 = vrot.slane %v238, 4
    %v240 = vadd.f32 %v238, %v239
    %v241 = vrot.slane %v240, 2
    %v242 = vadd.f32 %v240, %v241
    %v243 = vrot.slane %v242, 1
    %v244 = vadd.f32 %v242, %v243
    %v245 = vadd.f32 %v223, %v227
    %v246 = vrot.slane %v245, 4
    %v247 = vadd.f32 %v245, %v246
    %v248 = vrot.slane %v247, 2
    %v249 = vadd.f32 %v247, %v248
    %v250 = vrot.slane %v249, 1
    %v251 = vadd.f32 %v249, %v250
    %v252 = vadd.f32 %v225, %v229
    %v253 = vrot.slane %v252, 4
    %v254 = vadd.f32 %v252, %v253
    %v255 = vrot.slane %v254, 2
    %v256 = vadd.f32 %v254, %v255
    %v257 = vrot.slane %v256, 1
    %v258 = vadd.f32 %v256, %v257
    %v259 = vmul.f32 %v237, 0.25
    %v260 = vmul.f32 %v244, 0.25
    %v261 = vmul.f32 %v251, 0.25
    %v262 = vmul.f32 %v258, 0.25
    %v263 = vsub.f32 %v180, %v259
    %v264 = vsub.f32 %v182, %v260
    %v265 = vsub.f32 %v223, %v261
    %v266 = vsub.f32 %v225, %v262
    %v267 = vsub.f32 %v184, %v259
    %v268 = vsub.f32 %v186, %v260
    %v269 = vsub.f32 %v227, %v261
    %v270 = vsub.f32 %v229, %v262
    %v271 = vmul.f32 %v263, %v263
    %v272 = vmul.f32 %v264, %v264
    %v273 = vmul.f32 %v265, %v265
    %v274 = vmul.f32 %v266, %v266
    %v275 = vmul.f32 %v267, %v267
    %v276 = vmul.f32 %v268, %v268
    %v277 = vmul.f32 %v269, %v269
    %v278 = vmul.f32 %v270, %v270
    %v279 = vlaneseq
    %v280 = vshrl.u32 %v279, 7
    %v281 = vadd.s32 %v280, 8
    %vm282 = vcmp.lt.s32.totalorder %v280, 4
    %vm283 = vcmp.lt.s32.totalorder %v281, 4
    %v284 = vsel %vm282, %v271, 0.0
    %v285 = vsel %vm282, %v272, 0.0
    %v286 = vsel %vm282, %v273, 0.0
    %v287 = vsel %vm282, %v274, 0.0
    %v288 = vsel %vm283, %v275, 0.0
    %v289 = vsel %vm283, %v276, 0.0
    %v290 = vsel %vm283, %v277, 0.0
    %v291 = vsel %vm283, %v278, 0.0
    %v292 = vadd.f32 %v284, %v288
    %v293 = vrot.slane %v292, 4
    %v294 = vadd.f32 %v292, %v293
    %v295 = vrot.slane %v294, 2
    %v296 = vadd.f32 %v294, %v295
    %v297 = vrot.slane %v296, 1
    %v298 = vadd.f32 %v296, %v297
    %v299 = vadd.f32 %v285, %v289
    %v300 = vrot.slane %v299, 4
    %v301 = vadd.f32 %v299, %v300
    %v302 = vrot.slane %v301, 2
    %v303 = vadd.f32 %v301, %v302
    %v304 = vrot.slane %v303, 1
    %v305 = vadd.f32 %v303, %v304
    %v306 = vadd.f32 %v286, %v290
    %v307 = vrot.slane %v306, 4
    %v308 = vadd.f32 %v306, %v307
    %v309 = vrot.slane %v308, 2
    %v310 = vadd.f32 %v308, %v309
    %v311 = vrot.slane %v310, 1
    %v312 = vadd.f32 %v310, %v311
    %v313 = vadd.f32 %v287, %v291
    %v314 = vrot.slane %v313, 4
    %v315 = vadd.f32 %v313, %v314
    %v316 = vrot.slane %v315, 2
    %v317 = vadd.f32 %v315, %v316
    %v318 = vrot.slane %v317, 1
    %v319 = vadd.f32 %v317, %v318
    %v320 = vmul.f32 %v298, 0.25
    %v321 = vmul.f32 %v305, 0.25
    %v322 = vmul.f32 %v312, 0.25
    %v323 = vmul.f32 %v319, 0.25
    %v324 = vld [vmem:[%s2] sm:$0xf]
    %v325 = vadd.f32 %v320, 1e-05
    %v326 = vadd.f32 %v321, 1e-05
    %v327 = vadd.f32 %v322, 1e-05
    %v328 = vadd.f32 %v323, 1e-05
    %v329 = vrsqrt.pop %v325
    %v330 = vrsqrt.pop %v326
    %v331 = vrsqrt.pop %v327
    %v332 = vrsqrt.pop %v328
    %v337 = vcombine.low %v329, %v330
    %v338 = vcombine.low %v331, %v332
    %v340 = vunpack.c.l.s4 1966171168
    %v341 = vunpack.c.0.s8 %v340
    %v342 = vlaneseq
    %v343 = vshrl.u32 %v342, 7
    %v344 = vsub.s32 %v341, %v343
    %v345 = vrot.slane %v337, %v344
    %v347 = vunpack.c.l.s4 1966171168
    %v348 = vunpack.c.0.s8 %v347
    %v349 = vlaneseq
    %v350 = vshrl.u32 %v349, 7
    %v351 = vsub.s32 %v348, %v350
    %v352 = vrot.slane %v338, %v351
    %v353 = vcombine.low %v345, %v352
    %v355 = vunpack.c.l.s4 1966171168
    %v356 = vunpack.c.0.s8 %v355
    %v357 = vlaneseq
    %v358 = vshrl.u32 %v357, 7
    %v359 = vsub.s32 %v356, %v358
    %v360 = vrot.slane %v353, %v359
    %v362 = vmul.f32 %v324, %v360
    %v364 = vlaneseq
    %v365 = vshrl.u32 %v364, 7
    %v366 = vsub.s32 0, %v365
    %v367 = vrot.slane %v362, %v366
    %v368 = vlaneseq
    %v369 = vshrl.u32 %v368, 7
    %v370 = vsub.s32 1, %v369
    %v371 = vrot.slane %v362, %v370
    %v372 = vlaneseq
    %v373 = vshrl.u32 %v372, 7
    %v374 = vsub.s32 2, %v373
    %v375 = vrot.slane %v362, %v374
    %v376 = vlaneseq
    %v377 = vshrl.u32 %v376, 7
    %v378 = vsub.s32 3, %v377
    %v379 = vrot.slane %v362, %v378
    %v384 = vmul.f32 %v263, %v367
    %v385 = vmul.f32 %v264, %v371
    %v386 = vmul.f32 %v265, %v375
    %v387 = vmul.f32 %v266, %v379
    %v388 = vmul.f32 %v267, %v367
    %v389 = vmul.f32 %v268, %v371
    %v390 = vmul.f32 %v269, %v375
    %v391 = vmul.f32 %v270, %v379
    %v392 = vld [vmem:[%s3] sm:$0xf]
    %v394 = vlaneseq
    %v395 = vshrl.u32 %v394, 7
    %v396 = vsub.s32 0, %v395
    %v397 = vrot.slane %v392, %v396
    %v398 = vlaneseq
    %v399 = vshrl.u32 %v398, 7
    %v400 = vsub.s32 1, %v399
    %v401 = vrot.slane %v392, %v400
    %v402 = vlaneseq
    %v403 = vshrl.u32 %v402, 7
    %v404 = vsub.s32 2, %v403
    %v405 = vrot.slane %v392, %v404
    %v406 = vlaneseq
    %v407 = vshrl.u32 %v406, 7
    %v408 = vsub.s32 3, %v407
    %v409 = vrot.slane %v392, %v408
    %v414 = vadd.f32 %v384, %v397
    %v415 = vadd.f32 %v385, %v401
    %v416 = vadd.f32 %v386, %v405
    %v417 = vadd.f32 %v387, %v409
    %v418 = vadd.f32 %v388, %v397
    %v419 = vadd.f32 %v389, %v401
    %v420 = vadd.f32 %v390, %v405
    %v421 = vadd.f32 %v391, %v409
    %v422 = vmax.f32 %v414, 0.0
    %v423 = vmax.f32 %v415, 0.0
    %v424 = vmax.f32 %v416, 0.0
    %v425 = vmax.f32 %v417, 0.0
    %v426 = vmax.f32 %v418, 0.0
    %v427 = vmax.f32 %v419, 0.0
    %v428 = vmax.f32 %v420, 0.0
    %v429 = vmax.f32 %v421, 0.0
    %v430 = vpack.c.bf16 %v426, %v422
    %v431 = vpack.c.bf16 %v427, %v423
    %v432 = vpack.c.bf16 %v428, %v424
    %v433 = vpack.c.bf16 %v429, %v425
    %v434 = vld [vmem:[#allocation7] sm:$0xff]
    %v435 = vld [vmem:[#allocation7 + $0x8] sm:$0xf]
    %v436 = vld [vmem:[#allocation7 + $0xc] sm:$0xff]
    %v437 = vld [vmem:[#allocation7 + $0x14] sm:$0xf]
    %v438 = vld [vmem:[#allocation7 + $0x18] sm:$0xff]
    %v439 = vld [vmem:[#allocation7 + $0x20] sm:$0xf]
    %v440 = vld [vmem:[#allocation7 + $0x24] sm:$0xff]
    %v441 = vld [vmem:[#allocation7 + $0x2c] sm:$0xf]
    %v442 = vld [vmem:[#allocation7 + $0x30] sm:$0xff]
    %v443 = vld [vmem:[#allocation7 + $0x38] sm:$0xf]
    %v444 = vld [vmem:[#allocation7 + $0x3c] sm:$0xff]
    %v445 = vld [vmem:[#allocation7 + $0x44] sm:$0xf]
    %v446 = vld [vmem:[#allocation7 + $0x48] sm:$0xff]
    %v447 = vld [vmem:[#allocation7 + $0x50] sm:$0xf]
    %v448 = vld [vmem:[#allocation7 + $0x54] sm:$0xff]
    %v449 = vld [vmem:[#allocation7 + $0x5c] sm:$0xf]
    %v450 = vld [vmem:[#allocation7 + $0x60] sm:$0xff]
    %v451 = vld [vmem:[#allocation7 + $0x68] sm:$0xf]
    %v452 = vld [vmem:[#allocation7 + $0x6c] sm:$0xff]
    %v453 = vld [vmem:[#allocation7 + $0x74] sm:$0xf]
    %v454 = vld [vmem:[#allocation7 + $0x78] sm:$0xff]
    %v455 = vld [vmem:[#allocation7 + $0x80] sm:$0xf]
    %v456 = vld [vmem:[#allocation7 + $0x84] sm:$0xff]
    %v457 = vld [vmem:[#allocation7 + $0x8c] sm:$0xf]
    %v458 = vld [vmem:[#allocation7 + $0x90] sm:$0xff]
    %v459 = vld [vmem:[#allocation7 + $0x98] sm:$0xf]
    %v460 = vld [vmem:[#allocation7 + $0x9c] sm:$0xff]
    %v461 = vld [vmem:[#allocation7 + $0xa4] sm:$0xf]
    %v462 = vld [vmem:[#allocation7 + $0xa8] sm:$0xff]
    %v463 = vld [vmem:[#allocation7 + $0xb0] sm:$0xf]
    %v464 = vld [vmem:[#allocation7 + $0xb4] sm:$0xff]
    %v465 = vld [vmem:[#allocation7 + $0xbc] sm:$0xf]
    %v466 = vld [vmem:[#allocation7 + $0xc0] sm:$0xff]
    %v467 = vld [vmem:[#allocation7 + $0xc8] sm:$0xf]
    %v468 = vld [vmem:[#allocation7 + $0xcc] sm:$0xff]
    %v469 = vld [vmem:[#allocation7 + $0xd4] sm:$0xf]
    %v470 = vld [vmem:[#allocation7 + $0xd8] sm:$0xff]
    %v471 = vld [vmem:[#allocation7 + $0xe0] sm:$0xf]
    %v472 = vld [vmem:[#allocation7 + $0xe4] sm:$0xff]
    %v473 = vld [vmem:[#allocation7 + $0xec] sm:$0xf]
    %v474 = vld [vmem:[#allocation7 + $0xf0] sm:$0xff]
    %v475 = vld [vmem:[#allocation7 + $0xf8] sm:$0xf]
    %v476 = vld [vmem:[#allocation7 + $0xfc] sm:$0xff]
    %v477 = vld [vmem:[#allocation7 + $0x104] sm:$0xf]
    %v478 = vld [vmem:[#allocation7 + $0x108] sm:$0xff]
    %v479 = vld [vmem:[#allocation7 + $0x110] sm:$0xf]
    %v480 = vld [vmem:[#allocation7 + $0x114] sm:$0xff]
    %v481 = vld [vmem:[#allocation7 + $0x11c] sm:$0xf]
    %v482 = vld [vmem:[#allocation7 + $0x120] sm:$0xff]
    %v483 = vld [vmem:[#allocation7 + $0x128] sm:$0xf]
    %v484 = vld [vmem:[#allocation7 + $0x12c] sm:$0xff]
    %v485 = vld [vmem:[#allocation7 + $0x134] sm:$0xf]
    %v486 = vld [vmem:[#allocation7 + $0x138] sm:$0xff]
    %v487 = vld [vmem:[#allocation7 + $0x140] sm:$0xf]
    %v488 = vld [vmem:[#allocation7 + $0x144] sm:$0xff]
    %v489 = vld [vmem:[#allocation7 + $0x14c] sm:$0xf]
    %v490 = vld [vmem:[#allocation7 + $0x150] sm:$0xff]
    %v491 = vld [vmem:[#allocation7 + $0x158] sm:$0xf]
    %v492 = vld [vmem:[#allocation7 + $0x15c] sm:$0xff]
    %v493 = vld [vmem:[#allocation7 + $0x164] sm:$0xf]
    %v494 = vld [vmem:[#allocation7 + $0x168] sm:$0xff]
    %v495 = vld [vmem:[#allocation7 + $0x170] sm:$0xf]
    %v496 = vld [vmem:[#allocation7 + $0x174] sm:$0xff]
    %v497 = vld [vmem:[#allocation7 + $0x17c] sm:$0xf]
    %v498 = vld [vmem:[#allocation7 + $0x180] sm:$0xff]
    %v499 = vld [vmem:[#allocation7 + $0x188] sm:$0xf]
    %v500 = vld [vmem:[#allocation7 + $0x18c] sm:$0xff]
    %v501 = vld [vmem:[#allocation7 + $0x194] sm:$0xf]
    %v502 = vld [vmem:[#allocation7 + $0x198] sm:$0xff]
    %v503 = vld [vmem:[#allocation7 + $0x1a0] sm:$0xf]
    %v504 = vld [vmem:[#allocation7 + $0x1a4] sm:$0xff]
    %v505 = vld [vmem:[#allocation7 + $0x1ac] sm:$0xf]
    %v506 = vld [vmem:[#allocation7 + $0x1b0] sm:$0xff]
    %v507 = vld [vmem:[#allocation7 + $0x1b8] sm:$0xf]
    %v508 = vld [vmem:[#allocation7 + $0x1bc] sm:$0xff]
    %v509 = vld [vmem:[#allocation7 + $0x1c4] sm:$0xf]
    %v510 = vld [vmem:[#allocation7 + $0x1c8] sm:$0xff]
    %v511 = vld [vmem:[#allocation7 + $0x1d0] sm:$0xf]
    %v512 = vld [vmem:[#allocation7 + $0x1d4] sm:$0xff]
    %v513 = vld [vmem:[#allocation7 + $0x1dc] sm:$0xf]
    %v514 = vld [vmem:[#allocation7 + $0x1e0] sm:$0xff]
    %v515 = vld [vmem:[#allocation7 + $0x1e8] sm:$0xf]
    %v516 = vld [vmem:[#allocation7 + $0x1ec] sm:$0xff]
    %v517 = vld [vmem:[#allocation7 + $0x1f4] sm:$0xf]
    %v518 = vld [vmem:[#allocation7 + $0x1f8] sm:$0xff]
    %v519 = vld [vmem:[#allocation7 + $0x200] sm:$0xf]
    %v520 = vld [vmem:[#allocation7 + $0x204] sm:$0xff]
    %v521 = vld [vmem:[#allocation7 + $0x20c] sm:$0xf]
    %v522 = vld [vmem:[#allocation7 + $0x210] sm:$0xff]
    %v523 = vld [vmem:[#allocation7 + $0x218] sm:$0xf]
    %v524 = vld [vmem:[#allocation7 + $0x21c] sm:$0xff]
    %v525 = vld [vmem:[#allocation7 + $0x224] sm:$0xf]
    %v526 = vld [vmem:[#allocation7 + $0x228] sm:$0xff]
    %v527 = vld [vmem:[#allocation7 + $0x230] sm:$0xf]
    %v528 = vld [vmem:[#allocation7 + $0x234] sm:$0xff]
    %v529 = vld [vmem:[#allocation7 + $0x23c] sm:$0xf]
    %v530 = vld [vmem:[#allocation7 + $0x240] sm:$0xff]
    %v531 = vld [vmem:[#allocation7 + $0x248] sm:$0xf]
    %v532 = vld [vmem:[#allocation7 + $0x24c] sm:$0xff]
    %v533 = vld [vmem:[#allocation7 + $0x254] sm:$0xf]
    %v534 = vld [vmem:[#allocation7 + $0x258] sm:$0xff]
    %v535 = vld [vmem:[#allocation7 + $0x260] sm:$0xf]
    %v536 = vld [vmem:[#allocation7 + $0x264] sm:$0xff]
    %v537 = vld [vmem:[#allocation7 + $0x26c] sm:$0xf]
    %v538 = vld [vmem:[#allocation7 + $0x270] sm:$0xff]
    %v539 = vld [vmem:[#allocation7 + $0x278] sm:$0xf]
    %v540 = vld [vmem:[#allocation7 + $0x27c] sm:$0xff]
    %v541 = vld [vmem:[#allocation7 + $0x284] sm:$0xf]
    %v542 = vld [vmem:[#allocation7 + $0x288] sm:$0xff]
    %v543 = vld [vmem:[#allocation7 + $0x290] sm:$0xf]
    %v544 = vld [vmem:[#allocation7 + $0x294] sm:$0xff]
    %v545 = vld [vmem:[#allocation7 + $0x29c] sm:$0xf]
    %v546 = vld [vmem:[#allocation7 + $0x2a0] sm:$0xff]
    %v547 = vld [vmem:[#allocation7 + $0x2a8] sm:$0xf]
    %v548 = vld [vmem:[#allocation7 + $0x2ac] sm:$0xff]
    %v549 = vld [vmem:[#allocation7 + $0x2b4] sm:$0xf]
    %v550 = vld [vmem:[#allocation7 + $0x2b8] sm:$0xff]
    %v551 = vld [vmem:[#allocation7 + $0x2c0] sm:$0xf]
    %v552 = vld [vmem:[#allocation7 + $0x2c4] sm:$0xff]
    %v553 = vld [vmem:[#allocation7 + $0x2cc] sm:$0xf]
    %v554 = vld [vmem:[#allocation7 + $0x2d0] sm:$0xff]
    %v555 = vld [vmem:[#allocation7 + $0x2d8] sm:$0xf]
    %v556 = vld [vmem:[#allocation7 + $0x2dc] sm:$0xff]
    %v557 = vld [vmem:[#allocation7 + $0x2e4] sm:$0xf]
    %v558 = vld [vmem:[#allocation7 + $0x2e8] sm:$0xff]
    %v559 = vld [vmem:[#allocation7 + $0x2f0] sm:$0xf]
    %v560 = vld [vmem:[#allocation7 + $0x2f4] sm:$0xff]
    %v561 = vld [vmem:[#allocation7 + $0x2fc] sm:$0xf]
    %v562 = vld [vmem:[%s5] sm:$0x7]
    %v564 = vlaneseq
    %v565 = vshrl.u32 %v564, 7
    %v566 = vsub.s32 0, %v565
    %v567 = vrot.slane %v562, %v566
    %v568 = vlaneseq
    %v569 = vshrl.u32 %v568, 7
    %v570 = vsub.s32 1, %v569
    %v571 = vrot.slane %v562, %v570
    %v572 = vlaneseq
    %v573 = vshrl.u32 %v572, 7
    %v574 = vsub.s32 2, %v573
    %v575 = vrot.slane %v562, %v574
    %v707 = vunpack.c.l.b16 %v434
    %v708 = vunpack.c.h.b16 %v434
    %v709 = vunpack.c.l.b16 %v435
    %v710 = vunpack.c.l.b16 %v436
    %v711 = vunpack.c.h.b16 %v436
    %v712 = vunpack.c.l.b16 %v437
    %v713 = vunpack.c.l.b16 %v438
    %v714 = vunpack.c.h.b16 %v438
    %v715 = vunpack.c.l.b16 %v439
    %v716 = vunpack.c.l.b16 %v440
    %v717 = vunpack.c.h.b16 %v440
    %v718 = vunpack.c.l.b16 %v441
    %v719 = vunpack.c.l.b16 %v442
    %v720 = vunpack.c.h.b16 %v442
    %v721 = vunpack.c.l.b16 %v443
    %v722 = vunpack.c.l.b16 %v444
    %v723 = vunpack.c.h.b16 %v444
    %v724 = vunpack.c.l.b16 %v445
    %v725 = vunpack.c.l.b16 %v446
    %v726 = vunpack.c.h.b16 %v446
    %v727 = vunpack.c.l.b16 %v447
    %v728 = vunpack.c.l.b16 %v448
    %v729 = vunpack.c.h.b16 %v448
    %v730 = vunpack.c.l.b16 %v449
    %v731 = vunpack.c.l.b16 %v450
    %v732 = vunpack.c.h.b16 %v450
    %v733 = vunpack.c.l.b16 %v451
    %v734 = vunpack.c.l.b16 %v452
    %v735 = vunpack.c.h.b16 %v452
    %v736 = vunpack.c.l.b16 %v453
    %v737 = vunpack.c.l.b16 %v454
    %v738 = vunpack.c.h.b16 %v454
    %v739 = vunpack.c.l.b16 %v455
    %v740 = vunpack.c.l.b16 %v456
    %v741 = vunpack.c.h.b16 %v456
    %v742 = vunpack.c.l.b16 %v457
    %v743 = vunpack.c.l.b16 %v458
    %v744 = vunpack.c.h.b16 %v458
    %v745 = vunpack.c.l.b16 %v459
    %v746 = vunpack.c.l.b16 %v460
    %v747 = vunpack.c.h.b16 %v460
    %v748 = vunpack.c.l.b16 %v461
    %v749 = vunpack.c.l.b16 %v462
    %v750 = vunpack.c.h.b16 %v462
    %v751 = vunpack.c.l.b16 %v463
    %v752 = vunpack.c.l.b16 %v464
    %v753 = vunpack.c.h.b16 %v464
    %v754 = vunpack.c.l.b16 %v465
    %v755 = vunpack.c.l.b16 %v466
    %v756 = vunpack.c.h.b16 %v466
    %v757 = vunpack.c.l.b16 %v467
    %v758 = vunpack.c.l.b16 %v468
    %v759 = vunpack.c.h.b16 %v468
    %v760 = vunpack.c.l.b16 %v469
    %v761 = vunpack.c.l.b16 %v470
    %v762 = vunpack.c.h.b16 %v470
    %v763 = vunpack.c.l.b16 %v471
    %v764 = vunpack.c.l.b16 %v472
    %v765 = vunpack.c.h.b16 %v472
    %v766 = vunpack.c.l.b16 %v473
    %v767 = vunpack.c.l.b16 %v474
    %v768 = vunpack.c.h.b16 %v474
    %v769 = vunpack.c.l.b16 %v475
    %v770 = vunpack.c.l.b16 %v476
    %v771 = vunpack.c.h.b16 %v476
    %v772 = vunpack.c.l.b16 %v477
    %v773 = vunpack.c.l.b16 %v478
    %v774 = vunpack.c.h.b16 %v478
    %v775 = vunpack.c.l.b16 %v479
    %v776 = vunpack.c.l.b16 %v480
    %v777 = vunpack.c.h.b16 %v480
    %v778 = vunpack.c.l.b16 %v481
    %v779 = vunpack.c.l.b16 %v482
    %v780 = vunpack.c.h.b16 %v482
    %v781 = vunpack.c.l.b16 %v483
    %v782 = vunpack.c.l.b16 %v484
    %v783 = vunpack.c.h.b16 %v484
    %v784 = vunpack.c.l.b16 %v485
    %v785 = vunpack.c.l.b16 %v486
    %v786 = vunpack.c.h.b16 %v486
    %v787 = vunpack.c.l.b16 %v487
    %v788 = vunpack.c.l.b16 %v488
    %v789 = vunpack.c.h.b16 %v488
    %v790 = vunpack.c.l.b16 %v489
    %v791 = vunpack.c.l.b16 %v490
    %v792 = vunpack.c.h.b16 %v490
    %v793 = vunpack.c.l.b16 %v491
    %v794 = vunpack.c.l.b16 %v492
    %v795 = vunpack.c.h.b16 %v492
    %v796 = vunpack.c.l.b16 %v493
    %v797 = vunpack.c.l.b16 %v494
    %v798 = vunpack.c.h.b16 %v494
    %v799 = vunpack.c.l.b16 %v495
    %v800 = vunpack.c.l.b16 %v496
    %v801 = vunpack.c.h.b16 %v496
    %v802 = vunpack.c.l.b16 %v497
    %v803 = vunpack.c.l.b16 %v498
    %v804 = vunpack.c.h.b16 %v498
    %v805 = vunpack.c.l.b16 %v499
    %v806 = vunpack.c.l.b16 %v500
    %v807 = vunpack.c.h.b16 %v500
    %v808 = vunpack.c.l.b16 %v501
    %v809 = vunpack.c.l.b16 %v502
    %v810 = vunpack.c.h.b16 %v502
    %v811 = vunpack.c.l.b16 %v503
    %v812 = vunpack.c.l.b16 %v504
    %v813 = vunpack.c.h.b16 %v504
    %v814 = vunpack.c.l.b16 %v505
    %v815 = vunpack.c.l.b16 %v506
    %v816 = vunpack.c.h.b16 %v506
    %v817 = vunpack.c.l.b16 %v507
    %v818 = vunpack.c.l.b16 %v508
    %v819 = vunpack.c.h.b16 %v508
    %v820 = vunpack.c.l.b16 %v509
    %v821 = vunpack.c.l.b16 %v510
    %v822 = vunpack.c.h.b16 %v510
    %v823 = vunpack.c.l.b16 %v511
    %v824 = vunpack.c.l.b16 %v512
    %v825 = vunpack.c.h.b16 %v512
    %v826 = vunpack.c.l.b16 %v513
    %v827 = vunpack.c.l.b16 %v514
    %v828 = vunpack.c.h.b16 %v514
    %v829 = vunpack.c.l.b16 %v515
    %v830 = vunpack.c.l.b16 %v516
    %v831 = vunpack.c.h.b16 %v516
    %v832 = vunpack.c.l.b16 %v517
    %v833 = vunpack.c.l.b16 %v518
    %v834 = vunpack.c.h.b16 %v518
    %v835 = vunpack.c.l.b16 %v519
    %v836 = vunpack.c.l.b16 %v520
    %v837 = vunpack.c.h.b16 %v520
    %v838 = vunpack.c.l.b16 %v521
    %v839 = vunpack.c.l.b16 %v522
    %v840 = vunpack.c.h.b16 %v522
    %v841 = vunpack.c.l.b16 %v523
    %v842 = vunpack.c.l.b16 %v524
    %v843 = vunpack.c.h.b16 %v524
    %v844 = vunpack.c.l.b16 %v525
    %v845 = vunpack.c.l.b16 %v526
    %v846 = vunpack.c.h.b16 %v526
    %v847 = vunpack.c.l.b16 %v527
    %v848 = vunpack.c.l.b16 %v528
    %v849 = vunpack.c.h.b16 %v528
    %v850 = vunpack.c.l.b16 %v529
    %v851 = vunpack.c.l.b16 %v530
    %v852 = vunpack.c.h.b16 %v530
    %v853 = vunpack.c.l.b16 %v531
    %v854 = vunpack.c.l.b16 %v532
    %v855 = vunpack.c.h.b16 %v532
    %v856 = vunpack.c.l.b16 %v533
    %v857 = vunpack.c.l.b16 %v534
    %v858 = vunpack.c.h.b16 %v534
    %v859 = vunpack.c.l.b16 %v535
    %v860 = vunpack.c.l.b16 %v536
    %v861 = vunpack.c.h.b16 %v536
    %v862 = vunpack.c.l.b16 %v537
    %v863 = vunpack.c.l.b16 %v538
    %v864 = vunpack.c.h.b16 %v538
    %v865 = vunpack.c.l.b16 %v539
    %v866 = vunpack.c.l.b16 %v540
    %v867 = vunpack.c.h.b16 %v540
    %v868 = vunpack.c.l.b16 %v541
    %v869 = vunpack.c.l.b16 %v542
    %v870 = vunpack.c.h.b16 %v542
    %v871 = vunpack.c.l.b16 %v543
    %v872 = vunpack.c.l.b16 %v544
    %v873 = vunpack.c.h.b16 %v544
    %v874 = vunpack.c.l.b16 %v545
    %v875 = vunpack.c.l.b16 %v546
    %v876 = vunpack.c.h.b16 %v546
    %v877 = vunpack.c.l.b16 %v547
    %v878 = vunpack.c.l.b16 %v548
    %v879 = vunpack.c.h.b16 %v548
    %v880 = vunpack.c.l.b16 %v549
    %v881 = vunpack.c.l.b16 %v550
    %v882 = vunpack.c.h.b16 %v550
    %v883 = vunpack.c.l.b16 %v551
    %v884 = vunpack.c.l.b16 %v552
    %v885 = vunpack.c.h.b16 %v552
    %v886 = vunpack.c.l.b16 %v553
    %v887 = vunpack.c.l.b16 %v554
    %v888 = vunpack.c.h.b16 %v554
    %v889 = vunpack.c.l.b16 %v555
    %v890 = vunpack.c.l.b16 %v556
    %v891 = vunpack.c.h.b16 %v556
    %v892 = vunpack.c.l.b16 %v557
    %v893 = vunpack.c.l.b16 %v558
    %v894 = vunpack.c.h.b16 %v558
    %v895 = vunpack.c.l.b16 %v559
    %v896 = vunpack.c.l.b16 %v560
    %v897 = vunpack.c.h.b16 %v560
    %v898 = vunpack.c.l.b16 %v561
    %v899 = vpack.c.b16 %v710, %v707
    %v900 = vpack.c.b16 %v711, %v708
    %v901 = vpack.c.b16 %v712, %v709
    %v902 = vpack.c.b16 %v716, %v713
    %v903 = vpack.c.b16 %v717, %v714
    %v904 = vpack.c.b16 %v718, %v715
    %v905 = vpack.c.b16 %v722, %v719
    %v906 = vpack.c.b16 %v723, %v720
    %v907 = vpack.c.b16 %v724, %v721
    %v908 = vpack.c.b16 %v728, %v725
    %v909 = vpack.c.b16 %v729, %v726
    %v910 = vpack.c.b16 %v730, %v727
    %v911 = vpack.c.b16 %v734, %v731
    %v912 = vpack.c.b16 %v735, %v732
    %v913 = vpack.c.b16 %v736, %v733
    %v914 = vpack.c.b16 %v740, %v737
    %v915 = vpack.c.b16 %v741, %v738
    %v916 = vpack.c.b16 %v742, %v739
    %v917 = vpack.c.b16 %v746, %v743
    %v918 = vpack.c.b16 %v747, %v744
    %v919 = vpack.c.b16 %v748, %v745
    %v920 = vpack.c.b16 %v752, %v749
    %v921 = vpack.c.b16 %v753, %v750
    %v922 = vpack.c.b16 %v754, %v751
    %v923 = vpack.c.b16 %v758, %v755
    %v924 = vpack.c.b16 %v759, %v756
    %v925 = vpack.c.b16 %v760, %v757
    %v926 = vpack.c.b16 %v764, %v761
    %v927 = vpack.c.b16 %v765, %v762
    %v928 = vpack.c.b16 %v766, %v763
    %v929 = vpack.c.b16 %v770, %v767
    %v930 = vpack.c.b16 %v771, %v768
    %v931 = vpack.c.b16 %v772, %v769
    %v932 = vpack.c.b16 %v776, %v773
    %v933 = vpack.c.b16 %v777, %v774
    %v934 = vpack.c.b16 %v778, %v775
    %v935 = vpack.c.b16 %v782, %v779
    %v936 = vpack.c.b16 %v783, %v780
    %v937 = vpack.c.b16 %v784, %v781
    %v938 = vpack.c.b16 %v788, %v785
    %v939 = vpack.c.b16 %v789, %v786
    %v940 = vpack.c.b16 %v790, %v787
    %v941 = vpack.c.b16 %v794, %v791
    %v942 = vpack.c.b16 %v795, %v792
    %v943 = vpack.c.b16 %v796, %v793
    %v944 = vpack.c.b16 %v800, %v797
    %v945 = vpack.c.b16 %v801, %v798
    %v946 = vpack.c.b16 %v802, %v799
    %v947 = vpack.c.b16 %v806, %v803
    %v948 = vpack.c.b16 %v807, %v804
    %v949 = vpack.c.b16 %v808, %v805
    %v950 = vpack.c.b16 %v812, %v809
    %v951 = vpack.c.b16 %v813, %v810
    %v952 = vpack.c.b16 %v814, %v811
    %v953 = vpack.c.b16 %v818, %v815
    %v954 = vpack.c.b16 %v819, %v816
    %v955 = vpack.c.b16 %v820, %v817
    %v956 = vpack.c.b16 %v824, %v821
    %v957 = vpack.c.b16 %v825, %v822
    %v958 = vpack.c.b16 %v826, %v823
    %v959 = vpack.c.b16 %v830, %v827
    %v960 = vpack.c.b16 %v831, %v828
    %v961 = vpack.c.b16 %v832, %v829
    %v962 = vpack.c.b16 %v836, %v833
    %v963 = vpack.c.b16 %v837, %v834
    %v964 = vpack.c.b16 %v838, %v835
    %v965 = vpack.c.b16 %v842, %v839
    %v966 = vpack.c.b16 %v843, %v840
    %v967 = vpack.c.b16 %v844, %v841
    %v968 = vpack.c.b16 %v848, %v845
    %v969 = vpack.c.b16 %v849, %v846
    %v970 = vpack.c.b16 %v850, %v847
    %v971 = vpack.c.b16 %v854, %v851
    %v972 = vpack.c.b16 %v855, %v852
    %v973 = vpack.c.b16 %v856, %v853
    %v974 = vpack.c.b16 %v860, %v857
    %v975 = vpack.c.b16 %v861, %v858
    %v976 = vpack.c.b16 %v862, %v859
    %v977 = vpack.c.b16 %v866, %v863
    %v978 = vpack.c.b16 %v867, %v864
    %v979 = vpack.c.b16 %v868, %v865
    %v980 = vpack.c.b16 %v872, %v869
    %v981 = vpack.c.b16 %v873, %v870
    %v982 = vpack.c.b16 %v874, %v871
    %v983 = vpack.c.b16 %v878, %v875
    %v984 = vpack.c.b16 %v879, %v876
    %v985 = vpack.c.b16 %v880, %v877
    %v986 = vpack.c.b16 %v884, %v881
    %v987 = vpack.c.b16 %v885, %v882
    %v988 = vpack.c.b16 %v886, %v883
    %v989 = vpack.c.b16 %v890, %v887
    %v990 = vpack.c.b16 %v891, %v888
    %v991 = vpack.c.b16 %v892, %v889
    %v992 = vpack.c.b16 %v896, %v893
    %v993 = vpack.c.b16 %v897, %v894
    %v994 = vpack.c.b16 %v898, %v895
    %1091 = vmatprep.subr.bf16.mxu0 %v900
    %1092 = vmatpush1.bf16.msra.mxu0 %v899
    %1093 = vmatprep.subr.bf16.mxu0 %v903
    %1094 = vmatpush1.bf16.msra.mxu0 %v902
    %1095 = vmatprep.subr.bf16.mxu0 %v906
    %1096 = vmatpush1.bf16.msra.mxu0 %v905
    %1097 = vmatprep.subr.bf16.mxu0 %v909
    %1098 = vmatpush1.bf16.msra.mxu0 %v908
    %1099 = vmatprep.subr.bf16.mxu0 %v912
    %1100 = vmatpush1.bf16.msra.mxu0 %v911
    %1101 = vmatprep.subr.bf16.mxu0 %v915
    %1102 = vmatpush1.bf16.msra.mxu0 %v914
    %1103 = vmatprep.subr.bf16.mxu0 %v918
    %1104 = vmatpush1.bf16.msra.mxu0 %v917
    %1105 = vmatprep.subr.bf16.mxu0 %v921
    %1106 = vmatpush1.bf16.msra.mxu0 %v920
    %1107 = vmatprep.subr.bf16.mxu0 %v924
    %1108 = vmatpush1.bf16.msra.mxu0 %v923
    %1109 = vmatprep.subr.bf16.mxu0 %v927
    %1110 = vmatpush1.bf16.msra.mxu0 %v926
    %1111 = vmatprep.subr.bf16.mxu0 %v930
    %1112 = vmatpush1.bf16.msra.mxu0 %v929
    %1113 = vmatprep.subr.bf16.mxu0 %v933
    %1114 = vmatpush1.bf16.msra.mxu0 %v932
    %1115 = vmatprep.subr.bf16.mxu0 %v936
    %1116 = vmatpush1.bf16.msra.mxu0 %v935
    %1117 = vmatprep.subr.bf16.mxu0 %v939
    %1118 = vmatpush1.bf16.msra.mxu0 %v938
    %1119 = vmatprep.subr.bf16.mxu0 %v942
    %1120 = vmatpush1.bf16.msra.mxu0 %v941
    %1121 = vmatprep.subr.bf16.mxu0 %v945
    %1122 = vmatpush1.bf16.msra.mxu0 %v944
    %1123 = vmatprep.mubr.bf16.mxu0 %v431
    %1124 = vmatmul.mubr.bf16.gmra.mrb[0].mxu0 %v430
    %v1125 = vpop.f32.mrb[0].mxu0
    %v1126 = vadd.f32 %v567, %v1125
    %v1127 = vpop.f32.mrb[0].mxu0
    %v1128 = vadd.f32 %v571, %v1127
    %v1129 = vpop.f32.mrb[0].mxu0
    %v1130 = vadd.f32 %v567, %v1129
    %v1131 = vpop.f32.mrb[0].mxu0
    %v1132 = vadd.f32 %v571, %v1131
    %1133 = vdwg.mxu0
    %1134 = vmatprep.subr.bf16.mxu0 %v948
    %1135 = vmatpush1.bf16.msra.mxu0 %v947
    %1136 = vmatprep.subr.bf16.mxu0 %v951
    %1137 = vmatpush1.bf16.msra.mxu0 %v950
    %1138 = vmatprep.subr.bf16.mxu0 %v954
    %1139 = vmatpush1.bf16.msra.mxu0 %v953
    %1140 = vmatprep.subr.bf16.mxu0 %v957
    %1141 = vmatpush1.bf16.msra.mxu0 %v956
    %1142 = vmatprep.subr.bf16.mxu0 %v960
    %1143 = vmatpush1.bf16.msra.mxu0 %v959
    %1144 = vmatprep.subr.bf16.mxu0 %v963
    %1145 = vmatpush1.bf16.msra.mxu0 %v962
    %1146 = vmatprep.subr.bf16.mxu0 %v966
    %1147 = vmatpush1.bf16.msra.mxu0 %v965
    %1148 = vmatprep.subr.bf16.mxu0 %v969
    %1149 = vmatpush1.bf16.msra.mxu0 %v968
    %1150 = vmatprep.subr.bf16.mxu0 %v972
    %1151 = vmatpush1.bf16.msra.mxu0 %v971
    %1152 = vmatprep.subr.bf16.mxu0 %v975
    %1153 = vmatpush1.bf16.msra.mxu0 %v974
    %1154 = vmatprep.subr.bf16.mxu0 %v978
    %1155 = vmatpush1.bf16.msra.mxu0 %v977
    %1156 = vmatprep.subr.bf16.mxu0 %v981
    %1157 = vmatpush1.bf16.msra.mxu0 %v980
    %1158 = vmatprep.subr.bf16.mxu0 %v984
    %1159 = vmatpush1.bf16.msra.mxu0 %v983
    %1160 = vmatprep.subr.bf16.mxu0 %v987
    %1161 = vmatpush1.bf16.msra.mxu0 %v986
    %1162 = vmatprep.subr.bf16.mxu0 %v990
    %1163 = vmatpush1.bf16.msra.mxu0 %v989
    %1164 = vmatprep.subr.bf16.mxu0 %v993
    %1165 = vmatpush1.bf16.msra.mxu0 %v992
    %1166 = vmatprep.mubr.bf16.mxu0 %v433
    %1167 = vmatmul.mubr.bf16.gmra.mrb[0].mxu0 %v432
    %v1168 = vpop.f32.mrb[0].mxu0
    %v1169 = vadd.f32 %v1126, %v1168
    %v1170 = vpop.f32.mrb[0].mxu0
    %v1171 = vadd.f32 %v1128, %v1170
    %v1172 = vpop.f32.mrb[0].mxu0
    %v1173 = vadd.f32 %v1130, %v1172
    %v1174 = vpop.f32.mrb[0].mxu0
    %v1175 = vadd.f32 %v1132, %v1174
    %1176 = vdwg.mxu0
    %1177 = vmatprep.subr.bf16.mxu0 0
    %1178 = vmatpush1.bf16.msra.mxu0 %v901
    %1179 = vmatprep.subr.bf16.mxu0 0
    %1180 = vmatpush1.bf16.msra.mxu0 %v904
    %1181 = vmatprep.subr.bf16.mxu0 0
    %1182 = vmatpush1.bf16.msra.mxu0 %v907
    %1183 = vmatprep.subr.bf16.mxu0 0
    %1184 = vmatpush1.bf16.msra.mxu0 %v910
    %1185 = vmatprep.subr.bf16.mxu0 0
    %1186 = vmatpush1.bf16.msra.mxu0 %v913
    %1187 = vmatprep.subr.bf16.mxu0 0
    %1188 = vmatpush1.bf16.msra.mxu0 %v916
    %1189 = vmatprep.subr.bf16.mxu0 0
    %1190 = vmatpush1.bf16.msra.mxu0 %v919
    %1191 = vmatprep.subr.bf16.mxu0 0
    %1192 = vmatpush1.bf16.msra.mxu0 %v922
    %1193 = vmatprep.subr.bf16.mxu0 0
    %1194 = vmatpush1.bf16.msra.mxu0 %v925
    %1195 = vmatprep.subr.bf16.mxu0 0
    %1196 = vmatpush1.bf16.msra.mxu0 %v928
    %1197 = vmatprep.subr.bf16.mxu0 0
    %1198 = vmatpush1.bf16.msra.mxu0 %v931
    %1199 = vmatprep.subr.bf16.mxu0 0
    %1200 = vmatpush1.bf16.msra.mxu0 %v934
    %1201 = vmatprep.subr.bf16.mxu0 0
    %1202 = vmatpush1.bf16.msra.mxu0 %v937
    %1203 = vmatprep.subr.bf16.mxu0 0
    %1204 = vmatpush1.bf16.msra.mxu0 %v940
    %1205 = vmatprep.subr.bf16.mxu0 0
    %1206 = vmatpush1.bf16.msra.mxu0 %v943
    %1207 = vmatprep.subr.bf16.mxu0 0
    %1208 = vmatpush1.bf16.msra.mxu0 %v946
    %1209 = vmatprep.mubr.bf16.mxu0 %v431
    %1210 = vmatmul.mubr.bf16.gmra.mrb[0].mxu0 %v430
    %v1211 = vpop.f32.mrb[0].mxu0
    %v1212 = vadd.f32 %v575, %v1211
    %v1213 = vpop.f32.mrb[0].mxu0
    %v1214 = vpop.f32.mrb[0].mxu0
    %v1215 = vadd.f32 %v575, %v1214
    %v1216 = vpop.f32.mrb[0].mxu0
    %1217 = vdwg.mxu0
    %1218 = vmatprep.subr.bf16.mxu0 0
    %1219 = vmatpush1.bf16.msra.mxu0 %v949
    %1220 = vmatprep.subr.bf16.mxu0 0
    %1221 = vmatpush1.bf16.msra.mxu0 %v952
    %1222 = vmatprep.subr.bf16.mxu0 0
    %1223 = vmatpush1.bf16.msra.mxu0 %v955
    %1224 = vmatprep.subr.bf16.mxu0 0
    %1225 = vmatpush1.bf16.msra.mxu0 %v958
    %1226 = vmatprep.subr.bf16.mxu0 0
    %1227 = vmatpush1.bf16.msra.mxu0 %v961
    %1228 = vmatprep.subr.bf16.mxu0 0
    %1229 = vmatpush1.bf16.msra.mxu0 %v964
    %1230 = vmatprep.subr.bf16.mxu0 0
    %1231 = vmatpush1.bf16.msra.mxu0 %v967
    %1232 = vmatprep.subr.bf16.mxu0 0
    %1233 = vmatpush1.bf16.msra.mxu0 %v970
    %1234 = vmatprep.subr.bf16.mxu0 0
    %1235 = vmatpush1.bf16.msra.mxu0 %v973
    %1236 = vmatprep.subr.bf16.mxu0 0
    %1237 = vmatpush1.bf16.msra.mxu0 %v976
    %1238 = vmatprep.subr.bf16.mxu0 0
    %1239 = vmatpush1.bf16.msra.mxu0 %v979
    %1240 = vmatprep.subr.bf16.mxu0 0
    %1241 = vmatpush1.bf16.msra.mxu0 %v982
    %1242 = vmatprep.subr.bf16.mxu0 0
    %1243 = vmatpush1.bf16.msra.mxu0 %v985
    %1244 = vmatprep.subr.bf16.mxu0 0
    %1245 = vmatpush1.bf16.msra.mxu0 %v988
    %1246 = vmatprep.subr.bf16.mxu0 0
    %1247 = vmatpush1.bf16.msra.mxu0 %v991
    %1248 = vmatprep.subr.bf16.mxu0 0
    %1249 = vmatpush1.bf16.msra.mxu0 %v994
    %1250 = vmatprep.mubr.bf16.mxu0 %v433
    %1251 = vmatmul.mubr.bf16.gmra.mrb[0].mxu0 %v432
    %v1252 = vpop.f32.mrb[0].mxu0
    %v1253 = vadd.f32 %v1212, %v1252
    %v1254 = vpop.f32.mrb[0].mxu0
    %v1255 = vpop.f32.mrb[0].mxu0
    %v1256 = vadd.f32 %v1215, %v1255
    %v1257 = vpop.f32.mrb[0].mxu0
    %1258 = vdwg.mxu0
    %v1259 = vmax.f32 %v1169, 0.0
    %v1260 = vmax.f32 %v1171, 0.0
    %v1261 = vmax.f32 %v1253, 0.0
    %v1262 = vmax.f32 %v1173, 0.0
    %v1263 = vmax.f32 %v1175, 0.0
    %v1264 = vmax.f32 %v1256, 0.0
    %v1265 = vpack.c.bf16 %v1262, %v1259
    %v1266 = vpack.c.bf16 %v1263, %v1260
    %v1267 = vpack.c.bf16 %v1264, %v1261
    %v1268 = vld [vmem:[#allocation8] sm:$0xf]
    %v1269 = vld [vmem:[#allocation8 + $0x4] sm:$0xf]
    %v1270 = vld [vmem:[#allocation8 + $0x8] sm:$0xf]
    %v1271 = vld [vmem:[#allocation8 + $0xc] sm:$0xf]
    %v1272 = vld [vmem:[#allocation8 + $0x10] sm:$0xf]
    %v1273 = vld [vmem:[#allocation8 + $0x14] sm:$0xf]
    %v1274 = vld [vmem:[#allocation8 + $0x18] sm:$0xf]
    %v1275 = vld [vmem:[#allocation8 + $0x1c] sm:$0xf]
    %v1276 = vld [vmem:[#allocation8 + $0x20] sm:$0xf]
    %v1277 = vld [vmem:[#allocation8 + $0x24] sm:$0xf]
    %v1278 = vld [vmem:[#allocation8 + $0x28] sm:$0xf]
    %v1279 = vld [vmem:[#allocation8 + $0x2c] sm:$0xf]
    %v1280 = vld [vmem:[#allocation8 + $0x30] sm:$0xf]
    %v1281 = vld [vmem:[#allocation8 + $0x34] sm:$0xf]
    %v1282 = vld [vmem:[#allocation8 + $0x38] sm:$0xf]
    %v1283 = vld [vmem:[#allocation8 + $0x3c] sm:$0xf]
    %v1284 = vld [vmem:[#allocation8 + $0x40] sm:$0xf]
    %v1285 = vld [vmem:[#allocation8 + $0x44] sm:$0xf]
    %v1286 = vld [vmem:[#allocation8 + $0x48] sm:$0xf]
    %v1287 = vld [vmem:[#allocation8 + $0x4c] sm:$0xf]
    %v1288 = vld [vmem:[#allocation8 + $0x50] sm:$0xf]
    %v1289 = vld [vmem:[#allocation8 + $0x54] sm:$0xf]
    %v1290 = vld [vmem:[#allocation8 + $0x58] sm:$0xf]
    %v1291 = vld [vmem:[#allocation8 + $0x5c] sm:$0xf]
    %v1292 = vld [vmem:[#allocation8 + $0x60] sm:$0xf]
    %v1293 = vld [vmem:[#allocation8 + $0x64] sm:$0xf]
    %v1294 = vld [vmem:[#allocation8 + $0x68] sm:$0xf]
    %v1295 = vld [vmem:[#allocation8 + $0x6c] sm:$0xf]
    %v1296 = vld [vmem:[#allocation8 + $0x70] sm:$0xf]
    %v1297 = vld [vmem:[#allocation8 + $0x74] sm:$0xf]
    %v1298 = vld [vmem:[#allocation8 + $0x78] sm:$0xf]
    %v1299 = vld [vmem:[#allocation8 + $0x7c] sm:$0xf]
    %v1300 = vld [vmem:[#allocation8 + $0x80] sm:$0xf]
    %v1301 = vld [vmem:[#allocation8 + $0x84] sm:$0xf]
    %v1302 = vld [vmem:[#allocation8 + $0x88] sm:$0xf]
    %v1303 = vld [vmem:[#allocation8 + $0x8c] sm:$0xf]
    %v1304 = vld [vmem:[#allocation8 + $0x90] sm:$0xf]
    %v1305 = vld [vmem:[#allocation8 + $0x94] sm:$0xf]
    %v1306 = vld [vmem:[#allocation8 + $0x98] sm:$0xf]
    %v1307 = vld [vmem:[#allocation8 + $0x9c] sm:$0xf]
    %v1308 = vld [vmem:[#allocation8 + $0xa0] sm:$0xf]
    %v1309 = vld [vmem:[#allocation8 + $0xa4] sm:$0xf]
    %v1310 = vld [vmem:[#allocation8 + $0xa8] sm:$0xf]
    %v1311 = vld [vmem:[#allocation8 + $0xac] sm:$0xf]
    %v1312 = vld [vmem:[#allocation8 + $0xb0] sm:$0xf]
    %v1313 = vld [vmem:[#allocation8 + $0xb4] sm:$0xf]
    %v1314 = vld [vmem:[#allocation8 + $0xb8] sm:$0xf]
    %v1315 = vld [vmem:[#allocation8 + $0xbc] sm:$0xf]
    %v1316 = vld [vmem:[%s7] sm:$0x1]
    %v1318 = vlaneseq
    %v1319 = vshrl.u32 %v1318, 7
    %v1320 = vsub.s32 0, %v1319
    %v1321 = vrot.slane %v1316, %v1320
    %v1371 = vunpack.c.l.b16 %v1268
    %v1372 = vunpack.c.l.b16 %v1269
    %v1373 = vunpack.c.l.b16 %v1270
    %v1374 = vunpack.c.l.b16 %v1271
    %v1375 = vunpack.c.l.b16 %v1272
    %v1376 = vunpack.c.l.b16 %v1273
    %v1377 = vunpack.c.l.b16 %v1274
    %v1378 = vunpack.c.l.b16 %v1275
    %v1379 = vunpack.c.l.b16 %v1276
    %v1380 = vunpack.c.l.b16 %v1277
    %v1381 = vunpack.c.l.b16 %v1278
    %v1382 = vunpack.c.l.b16 %v1279
    %v1383 = vunpack.c.l.b16 %v1280
    %v1384 = vunpack.c.l.b16 %v1281
    %v1385 = vunpack.c.l.b16 %v1282
    %v1386 = vunpack.c.l.b16 %v1283
    %v1387 = vunpack.c.l.b16 %v1284
    %v1388 = vunpack.c.l.b16 %v1285
    %v1389 = vunpack.c.l.b16 %v1286
    %v1390 = vunpack.c.l.b16 %v1287
    %v1391 = vunpack.c.l.b16 %v1288
    %v1392 = vunpack.c.l.b16 %v1289
    %v1393 = vunpack.c.l.b16 %v1290
    %v1394 = vunpack.c.l.b16 %v1291
    %v1395 = vunpack.c.l.b16 %v1292
    %v1396 = vunpack.c.l.b16 %v1293
    %v1397 = vunpack.c.l.b16 %v1294
    %v1398 = vunpack.c.l.b16 %v1295
    %v1399 = vunpack.c.l.b16 %v1296
    %v1400 = vunpack.c.l.b16 %v1297
    %v1401 = vunpack.c.l.b16 %v1298
    %v1402 = vunpack.c.l.b16 %v1299
    %v1403 = vunpack.c.l.b16 %v1300
    %v1404 = vunpack.c.l.b16 %v1301
    %v1405 = vunpack.c.l.b16 %v1302
    %v1406 = vunpack.c.l.b16 %v1303
    %v1407 = vunpack.c.l.b16 %v1304
    %v1408 = vunpack.c.l.b16 %v1305
    %v1409 = vunpack.c.l.b16 %v1306
    %v1410 = vunpack.c.l.b16 %v1307
    %v1411 = vunpack.c.l.b16 %v1308
    %v1412 = vunpack.c.l.b16 %v1309
    %v1413 = vunpack.c.l.b16 %v1310
    %v1414 = vunpack.c.l.b16 %v1311
    %v1415 = vunpack.c.l.b16 %v1312
    %v1416 = vunpack.c.l.b16 %v1313
    %v1417 = vunpack.c.l.b16 %v1314
    %v1418 = vunpack.c.l.b16 %v1315
    %v1419 = vpack.c.b16 %v1372, %v1371
    %v1420 = vpack.c.b16 %v1374, %v1373
    %v1421 = vpack.c.b16 %v1376, %v1375
    %v1422 = vpack.c.b16 %v1378, %v1377
    %v1423 = vpack.c.b16 %v1380, %v1379
    %v1424 = vpack.c.b16 %v1382, %v1381
    %v1425 = vpack.c.b16 %v1384, %v1383
    %v1426 = vpack.c.b16 %v1386, %v1385
    %v1427 = vpack.c.b16 %v1388, %v1387
    %v1428 = vpack.c.b16 %v1390, %v1389
    %v1429 = vpack.c.b16 %v1392, %v1391
    %v1430 = vpack.c.b16 %v1394, %v1393
    %v1431 = vpack.c.b16 %v1396, %v1395
    %v1432 = vpack.c.b16 %v1398, %v1397
    %v1433 = vpack.c.b16 %v1400, %v1399
    %v1434 = vpack.c.b16 %v1402, %v1401
    %v1435 = vpack.c.b16 %v1404, %v1403
    %v1436 = vpack.c.b16 %v1406, %v1405
    %v1437 = vpack.c.b16 %v1408, %v1407
    %v1438 = vpack.c.b16 %v1410, %v1409
    %v1439 = vpack.c.b16 %v1412, %v1411
    %v1440 = vpack.c.b16 %v1414, %v1413
    %v1441 = vpack.c.b16 %v1416, %v1415
    %v1442 = vpack.c.b16 %v1418, %v1417
    %1467 = vmatprep.subr.bf16.mxu0 0
    %1468 = vmatpush1.bf16.msra.mxu0 %v1419
    %1469 = vmatprep.subr.bf16.mxu0 0
    %1470 = vmatpush1.bf16.msra.mxu0 %v1420
    %1471 = vmatprep.subr.bf16.mxu0 0
    %1472 = vmatpush1.bf16.msra.mxu0 %v1421
    %1473 = vmatprep.subr.bf16.mxu0 0
    %1474 = vmatpush1.bf16.msra.mxu0 %v1422
    %1475 = vmatprep.subr.bf16.mxu0 0
    %1476 = vmatpush1.bf16.msra.mxu0 %v1423
    %1477 = vmatprep.subr.bf16.mxu0 0
    %1478 = vmatpush1.bf16.msra.mxu0 %v1424
    %1479 = vmatprep.subr.bf16.mxu0 0
    %1480 = vmatpush1.bf16.msra.mxu0 %v1425
    %1481 = vmatprep.subr.bf16.mxu0 0
    %1482 = vmatpush1.bf16.msra.mxu0 %v1426
    %1483 = vmatprep.subr.bf16.mxu0 0
    %1484 = vmatpush1.bf16.msra.mxu0 %v1427
    %1485 = vmatprep.subr.bf16.mxu0 0
    %1486 = vmatpush1.bf16.msra.mxu0 %v1428
    %1487 = vmatprep.subr.bf16.mxu0 0
    %1488 = vmatpush1.bf16.msra.mxu0 %v1429
    %1489 = vmatprep.subr.bf16.mxu0 0
    %1490 = vmatpush1.bf16.msra.mxu0 %v1430
    %1491 = vmatprep.subr.bf16.mxu0 0
    %1492 = vmatpush1.bf16.msra.mxu0 %v1431
    %1493 = vmatprep.subr.bf16.mxu0 0
    %1494 = vmatpush1.bf16.msra.mxu0 %v1432
    %1495 = vmatprep.subr.bf16.mxu0 0
    %1496 = vmatpush1.bf16.msra.mxu0 %v1433
    %1497 = vmatprep.subr.bf16.mxu0 0
    %1498 = vmatpush1.bf16.msra.mxu0 %v1434
    %1499 = vmatprep.mubr.bf16.mxu0 %v1266
    %1500 = vmatmul.mubr.bf16.gmra.mrb[0].mxu0 %v1265
    %v1501 = vpop.f32.mrb[0].mxu0
    %v1502 = vadd.f32 %v1321, %v1501
    %v1503 = vpop.f32.mrb[0].mxu0
    %v1504 = vpop.f32.mrb[0].mxu0
    %v1505 = vadd.f32 %v1321, %v1504
    %v1506 = vpop.f32.mrb[0].mxu0
    %1507 = vdwg.mxu0
    %1508 = vmatprep.subr.bf16.mxu0 0
    %1509 = vmatpush1.bf16.msra.mxu0 %v1435
    %1510 = vmatprep.subr.bf16.mxu0 0
    %1511 = vmatpush1.bf16.msra.mxu0 %v1436
    %1512 = vmatprep.subr.bf16.mxu0 0
    %1513 = vmatpush1.bf16.msra.mxu0 %v1437
    %1514 = vmatprep.subr.bf16.mxu0 0
    %1515 = vmatpush1.bf16.msra.mxu0 %v1438
    %1516 = vmatprep.subr.bf16.mxu0 0
    %1517 = vmatpush1.bf16.msra.mxu0 %v1439
    %1518 = vmatprep.subr.bf16.mxu0 0
    %1519 = vmatpush1.bf16.msra.mxu0 %v1440
    %1520 = vmatprep.subr.bf16.mxu0 0
    %1521 = vmatpush1.bf16.msra.mxu0 %v1441
    %1522 = vmatprep.subr.bf16.mxu0 0
    %1523 = vmatpush1.bf16.msra.mxu0 %v1442
    %1524 = vmatprep.subr.bf16.mxu0 0
    %1525 = vmatpush1.bf16.msra.mxu0 0
    %1526 = vmatprep.subr.bf16.mxu0 0
    %1527 = vmatpush1.bf16.msra.mxu0 0
    %1528 = vmatprep.subr.bf16.mxu0 0
    %1529 = vmatpush1.bf16.msra.mxu0 0
    %1530 = vmatprep.subr.bf16.mxu0 0
    %1531 = vmatpush1.bf16.msra.mxu0 0
    %1532 = vmatprep.subr.bf16.mxu0 0
    %1533 = vmatpush1.bf16.msra.mxu0 0
    %1534 = vmatprep.subr.bf16.mxu0 0
    %1535 = vmatpush1.bf16.msra.mxu0 0
    %1536 = vmatprep.subr.bf16.mxu0 0
    %1537 = vmatpush1.bf16.msra.mxu0 0
    %1538 = vmatprep.subr.bf16.mxu0 0
    %1539 = vmatpush1.bf16.msra.mxu0 0
    %1540 = vmatprep.mubr.bf16.mxu0 0
    %1541 = vmatmul.mubr.bf16.gmra.mrb[0].mxu0 %v1267
    %v1542 = vpop.f32.mrb[0].mxu0
    %v1543 = vadd.f32 %v1502, %v1542
    %v1544 = vpop.f32.mrb[0].mxu0
    %v1545 = vpop.f32.mrb[0].mxu0
    %v1546 = vadd.f32 %v1505, %v1545
    %v1547 = vpop.f32.mrb[0].mxu0
    %1548 = vdwg.mxu0
    %v1549 = vtanh.pop %v1543
    %v1550 = vtanh.pop %v1546
    %1551 = vst [vmem:[#allocation10] sm:$0xff] %v1549
    %1552 = vst [vmem:[#allocation10 + $0x8] sm:$0xff] %v1550
    // Predicated region
    $region50: #{tpu_custom_call.1} parent=1 // pred_check
      _
    $region51: #{tpu_custom_call.1} parent=1 // pred_check_branch
      %1554 = sbr.rel (0) target = $region53
    $region52: #{tpu_custom_call.1} parent=1 // pred_region
      %s1556 = ssub.s32 256, 256
      %1557 = vsyncadd [#allocation4], %s1556
      %s1558 = sshll.u32 [#allocation10], 4
      %s1559 = int_to_ptr.vmem [resolvable:$true] %s1558
      %1564 = dma.vmem_to_hbm [thread:$0]  %s1559, 256, %s8, [#allocation4], 128, 128, 8
    $region53: #{tpu_custom_call.1} parent=1 // pred_fallthru
      _
    // Predicated region
    $region54: #{tpu_custom_call.1} parent=1 // pred_check
      _
    $region55: #{tpu_custom_call.1} parent=1 // pred_check_branch
      %1566 = sbr.rel (0) target = $region57
    $region56: #{tpu_custom_call.1} parent=1 // pred_region
      %1567 = dma.done [#allocation4], 256
    $region57: #{tpu_custom_call.1} parent=1 // pred_fallthru
      _
    %1568 = vsyncpa [#allocation3], 1
    %1569 = vsyncpa [#allocation6], 1
    %1570 = vsyncpa [#allocation9], 1
    %1571 = vsyncpa [#allocation4], 1

</llo_original>
